<compile_context>
chip_gen: v7x
topology: tpu7x:2x2x1
jax: 0.10.0
libtpu: 0.0.40
codegen_flags: <defaults>
</compile_context>

<pallas_src>
from functools import partial

import jax
import jax.numpy as jnp
from jax.experimental import pallas as pl
from jax.experimental.pallas import tpu as pltpu


def _weight_train2_kernel(stl_ref, strT_ref, side_ref, w_ref,
                          fuse_ref, trace_ref, sq_ref, *, n_side):
    i = pl.program_id(0)
    j = pl.program_id(1)
    tm, tn = fuse_ref.shape

    # Per-row-block loss accumulators live in the (tm, 1) output blocks, which
    # are revisited across the j ("arbitrary") axis.  Zero them on first visit.
    @pl.when(j == 0)
    def _init():
        trace_ref[...] = jnp.zeros_like(trace_ref)
        sq_ref[...] = jnp.zeros_like(sq_ref)

    a = stl_ref[...]                       # (tm, D)  f32
    bT = strT_ref[...]                     # (D, tn)  f32 (pre-transposed)

    # st_score tile = st_feature[l] @ st_feature[r].T  -> MXU, f32 accumulate.
    st = jnp.dot(a, bT, preferred_element_type=jnp.float32)   # (tm, tn)

    # Single pass over the side modalities: each VMEM tile is read once and
    # feeds both the L2-norm accumulator and the fc-weighted sum.
    w0 = w_ref[0, 0]
    sq = st * st
    weighted = w0 * st
    for m in range(n_side):                # n_side is tiny -> static unroll
        wm = w_ref[0, m + 1]
        s = side_ref[m]                    # (tm, tn), loaded once
        sq = sq + s * s
        weighted = weighted + wm * s

    # F.normalize over the modality axis (p=2, eps=1e-12), then fc fusion.
    norm = jnp.maximum(jnp.sqrt(sq), 1e-12)
    fuse = weighted / norm
    fuse_ref[...] = fuse

    # Tiled cosine-loss partials (mask offset by the tile's global indices).
    row = jax.lax.broadcasted_iota(jnp.int32, (tm, tn), 0) + i * tm
    col = jax.lax.broadcasted_iota(jnp.int32, (tm, tn), 1) + j * tn
    diag = jnp.where(row == col, fuse, 0.0)
    trace_ref[...] += jnp.sum(diag, axis=1, keepdims=True)        # (tm, 1)
    sq_ref[...] += jnp.sum(fuse * fuse, axis=1, keepdims=True)    # (tm, 1)


def weight_train2_forward(fc_weight, batch_pair, st_feature, side_modalities,
                          *, tm=256, tn=256):
    """Mirrors Weight_train_2.forward: returns (fc_weight, cos_loss, fuse)."""
    # --- glue: data-dependent gathers (l / r indexing, np.ix_ equivalent) ---
    l = batch_pair[:, 0].astype(jnp.int32)
    r = batch_pair[:, 1].astype(jnp.int32)
    st_l = st_feature[l].astype(jnp.float32)                  # (B, D)
    st_rT = st_feature[r].astype(jnp.float32).T               # (D, B)

    side_list = []
    for name, score in side_modalities.items():
        if 'Att' in name:
            continue
        min_num = score.shape[0]
        r_ = r - min_num
        side_list.append(score[l[:, None], r_[None, :]].astype(jnp.float32))
    n_side = len(side_list)
    assert n_side >= 1, "need at least one non-'Att' side modality"
    assert fc_weight.shape == (1, n_side + 1), (
        "fc weight width must equal 1 (st_score) + #non-'Att' side modalities, "
        f"got {fc_weight.shape} vs {(1, n_side + 1)}")
    side = jnp.stack(side_list, axis=0)                        # (M, B, B)

    B, D = st_l.shape
    # Pad B up to the tile so every output tile is lane-dense (mult. of 128).
    bp_r = ((B + tm - 1) // tm) * tm
    bp_c = ((B + tn - 1) // tn) * tn
    st_l_p = jnp.pad(st_l, ((0, bp_r - B), (0, 0)))
    st_rT_p = jnp.pad(st_rT, ((0, 0), (0, bp_c - B)))
    side_p = jnp.pad(side, ((0, 0), (0, bp_r - B), (0, bp_c - B)))

    grid = (bp_r // tm, bp_c // tn)
    kernel = partial(_weight_train2_kernel, n_side=n_side)

    fuse_p, trace_rows, sq_rows = pl.pallas_call(
        kernel,
        grid=grid,
        out_shape=(
            jax.ShapeDtypeStruct((bp_r, bp_c), jnp.float32),   # fuse matrix
            jax.ShapeDtypeStruct((bp_r, 1), jnp.float32),      # per-row trace
            jax.ShapeDtypeStruct((bp_r, 1), jnp.float32),      # per-row sum(f^2)
        ),
        in_specs=[
            pl.BlockSpec((tm, D), lambda i, j: (i, 0)),              # st_l tile
            pl.BlockSpec((D, tn), lambda i, j: (0, j)),              # st_r^T tile
            pl.BlockSpec((n_side, tm, tn), lambda i, j: (0, i, j)),  # side tiles
            pl.BlockSpec(memory_space=pltpu.MemorySpace.SMEM),       # fc weight
        ],
        out_specs=(
            pl.BlockSpec((tm, tn), lambda i, j: (i, j)),
            pl.BlockSpec((tm, 1), lambda i, j: (i, 0)),   # accumulated over j
            pl.BlockSpec((tm, 1), lambda i, j: (i, 0)),   # accumulated over j
        ),
        compiler_params=pltpu.CompilerParams(
            dimension_semantics=("parallel", "arbitrary")),
    )(st_l_p, st_rT_p, side_p, fc_weight.astype(jnp.float32))

    # Cheap O(B) finalize in JAX (padded rows/cols contribute exactly 0).
    trace = jnp.sum(trace_rows)
    fnorm = jnp.sqrt(jnp.sum(sq_rows))
    gnorm = jnp.sqrt(jnp.float32(B))                        # ||eye(B)||_F
    # torch.cosine_similarity clamps each norm separately (eps=1e-8).
    denom = jnp.maximum(fnorm, 1e-8) * jnp.maximum(gnorm, 1e-8)
    cos_loss = 1.0 - trace / denom

    fuse = fuse_p[:B, :B]
    return fc_weight, cos_loss, fuse


def _reference(fc_weight, batch_pair, st_feature, side_modalities):
    """Pure-JAX mirror of the PyTorch forward, for a correctness check."""
    l = batch_pair[:, 0].astype(jnp.int32)
    r = batch_pair[:, 1].astype(jnp.int32)
    st = st_feature[l] @ st_feature[r].T
    mats = [st]
    for name, score in side_modalities.items():
        if 'Att' in name:
            continue
        r_ = r - score.shape[0]
        mats.append(score[l[:, None], r_[None, :]])
    t = jnp.stack(mats, axis=1).astype(jnp.float32)          # (B, K, B)
    norm = jnp.maximum(jnp.linalg.norm(t, axis=1, keepdims=True), 1e-12)
    t = t / norm
    reshaped = jnp.transpose(t, (0, 2, 1)).reshape(-1, fc_weight.shape[1])
    fuse = (reshaped @ fc_weight.T).reshape(t.shape[0], t.shape[2])
    gold = jnp.eye(fuse.shape[0], dtype=jnp.float32)
    num = jnp.sum(fuse * gold)
    den = (jnp.maximum(jnp.linalg.norm(fuse.ravel()), 1e-8)
           * jnp.maximum(jnp.linalg.norm(gold.ravel()), 1e-8))
    return 1.0 - num / den, fuse


if __name__ == "__main__":
    key = jax.random.PRNGKey(0)
    B, D, half = 200, 32, 220      # batch pairs, feature dim, entities per side
    N = 2 * half
    n_view = 4                     # st_score + 2 non-'Att' side modalities
    k1, k2, k3, k4, k5, k6 = jax.random.split(key, 6)

    st_feature = jax.random.normal(k1, (N, D), jnp.float32)
    side_modalities = {
        "img_score": jax.random.normal(k2, (half, half), jnp.float32),
        "Att_score": jnp.zeros((half, half), jnp.float32),   # skipped ('Att')
        "rel_score": jax.random.normal(k3, (half, half), jnp.float32),
    }
    l_idx = jax.random.permutation(k4, half)[:B].astype(jnp.int32)
    r_idx = half + jax.random.permutation(k5, half)[:B].astype(jnp.int32)
    batch_pair = jnp.stack([l_idx, r_idx], axis=1)           # (B, 2)

    # nn.Linear(N_view-1, 1, bias=False) style uniform init, deterministic.
    limit = 1.0 / float(n_view - 1) ** 0.5
    fc_weight = jax.random.uniform(k6, (1, n_view - 1), jnp.float32, -limit, limit)

    # 128x128 tiles here so the small demo exercises a (2, 2) grid + padding.
    fwd = jax.jit(partial(weight_train2_forward, tm=128, tn=128))
    w_out, loss, fuse = fwd(fc_weight, batch_pair, st_feature, side_modalities)
    jax.block_until_ready((w_out, loss, fuse))

    ref_loss, ref_fuse = _reference(fc_weight, batch_pair, st_feature,
                                    side_modalities)
    assert abs(float(loss) - float(ref_loss)) < 1e-3, (float(loss), float(ref_loss))
    max_diff = float(jnp.max(jnp.abs(fuse - ref_fuse)))
    assert max_diff < 1e-2, max_diff
    print("KERNEL_OK")
</pallas_src>

<mosaic_0001>
module attributes {stable_mosaic.version = 11 : i64} {
  func.func private @main(%arg0: i32) attributes {dimension_semantics = [#tpu.dimension_semantics<core_parallel>], iteration_bounds = array<i64: 2>, tpu.core_type = #tpu.core_type<sc_scalar_subcore>, window_params = []} {
    return
  }
}

module attributes {stable_mosaic.version = 11 : i64} {
  func.func private @main(%arg0: i32) attributes {dimension_semantics = [#tpu.dimension_semantics<core_parallel>], iteration_bounds = array<i64: 2>, tpu.core_type = #tpu.core_type<sc_scalar_subcore>, window_params = []} {
    return
  }
}

module attributes {stable_mosaic.version = 11 : i64} {
  func.func @_weight_train2_kernel(%arg0: i32, %arg1: i32, %arg2: memref<128x32xf32, #tpu.memory_space<vmem>>, %arg3: memref<32x128xf32, #tpu.memory_space<vmem>>, %arg4: memref<2x128x128xf32, #tpu.memory_space<vmem>>, %arg5: memref<1x3xf32, #tpu.memory_space<smem>>, %arg6: memref<128x128xf32, #tpu.memory_space<vmem>>, %arg7: memref<128x1xf32, #tpu.memory_space<vmem>>, %arg8: memref<128x1xf32, #tpu.memory_space<vmem>>) attributes {dimension_semantics = [#tpu.dimension_semantics<parallel>, #tpu.dimension_semantics<arbitrary>], iteration_bounds = array<i64: 2, 2>, scalar_prefetch = 0 : i64, scratch_operands = 0 : i64, tpu.core_type = #tpu.core_type<tc>, window_params = [{transform_indices = @transform_0, window_bounds = array<i64: 128, 32>}, {transform_indices = @transform_1, window_bounds = array<i64: 32, 128>}, {transform_indices = @transform_2, window_bounds = array<i64: 2, 128, 128>}, {transform_indices = @transform_3, window_bounds = array<i64: 1, 3>}, {transform_indices = @transform_4, window_bounds = array<i64: 128, 128>}, {transform_indices = @transform_5, window_bounds = array<i64: 128, 1>}, {transform_indices = @transform_6, window_bounds = array<i64: 128, 1>}]} {
    %c0_i32 = arith.constant 0 : i32
    %0 = arith.cmpi eq, %arg1, %c0_i32 : i32
    %1 = arith.extui %0 : i1 to i32
    %c0_i32_0 = arith.constant 0 : i32
    %2 = arith.cmpi ne, %1, %c0_i32_0 : i32
    scf.if %2 {
      %cst_29 = arith.constant 0.000000e+00 : f32
      %53 = vector.broadcast %cst_29 : f32 to vector<128x1xf32>
      %c0_30 = arith.constant 0 : index
      %c0_31 = arith.constant 0 : index
      %54 = vector.load %arg7[%c0_30, %c0_31] : memref<128x1xf32, #tpu.memory_space<vmem>>, vector<128x1xf32>
      tpu.vector_store %arg7[%c0_30, %c0_31], %53 {strides = array<i32>} : memref<128x1xf32, #tpu.memory_space<vmem>>, vector<128x1xf32>,
      %cst_32 = arith.constant 0.000000e+00 : f32
      %55 = vector.broadcast %cst_32 : f32 to vector<128x1xf32>
      %c0_33 = arith.constant 0 : index
      %c0_34 = arith.constant 0 : index
      %56 = vector.load %arg8[%c0_33, %c0_34] : memref<128x1xf32, #tpu.memory_space<vmem>>, vector<128x1xf32>
      tpu.vector_store %arg8[%c0_33, %c0_34], %55 {strides = array<i32>} : memref<128x1xf32, #tpu.memory_space<vmem>>, vector<128x1xf32>,
    } else {
    }
    %c0 = arith.constant 0 : index
    %c0_1 = arith.constant 0 : index
    %3 = vector.load %arg2[%c0, %c0_1] : memref<128x32xf32, #tpu.memory_space<vmem>>, vector<128x32xf32>
    %c0_2 = arith.constant 0 : index
    %c0_3 = arith.constant 0 : index
    %4 = vector.load %arg3[%c0_2, %c0_3] : memref<32x128xf32, #tpu.memory_space<vmem>>, vector<32x128xf32>
    %cst = arith.constant dense<0.000000e+00> : vector<128x128xf32>
    %5 = tpu.matmul %3, %4, %cst {dimension_numbers = #tpu.dot_dimension_numbers<[1], [0], [0], [1], [0, 0, 1, 1], [], []>} : vector<128x32xf32>, vector<32x128xf32>, vector<128x128xf32> -> vector<128x128xf32>
    %c0_4 = arith.constant 0 : index
    %c0_5 = arith.constant 0 : index
    %6 = memref.load %arg5[%c0_4, %c0_5] : memref<1x3xf32, #tpu.memory_space<smem>>
    %7 = arith.mulf %5, %5 : vector<128x128xf32>
    %8 = vector.broadcast %6 : f32 to vector<128x128xf32>
    %9 = arith.mulf %8, %5 : vector<128x128xf32>
    %c0_6 = arith.constant 0 : index
    %c1 = arith.constant 1 : index
    %10 = memref.load %arg5[%c0_6, %c1] : memref<1x3xf32, #tpu.memory_space<smem>>
    %c0_7 = arith.constant 0 : index
    %c0_8 = arith.constant 0 : index
    %c0_9 = arith.constant 0 : index
    %11 = vector.load %arg4[%c0_7, %c0_8, %c0_9] : memref<2x128x128xf32, #tpu.memory_space<vmem>>, vector<1x128x128xf32>
    %12 = vector.shape_cast %11 : vector<1x128x128xf32> to vector<128x128xf32>
    %13 = arith.mulf %12, %12 : vector<128x128xf32>
    %14 = arith.addf %7, %13 : vector<128x128xf32>
    %15 = vector.broadcast %10 : f32 to vector<128x128xf32>
    %16 = arith.mulf %15, %12 : vector<128x128xf32>
    %17 = arith.addf %9, %16 : vector<128x128xf32>
    %c0_10 = arith.constant 0 : index
    %c2 = arith.constant 2 : index
    %18 = memref.load %arg5[%c0_10, %c2] : memref<1x3xf32, #tpu.memory_space<smem>>
    %c1_11 = arith.constant 1 : index
    %c0_12 = arith.constant 0 : index
    %c0_13 = arith.constant 0 : index
    %19 = vector.load %arg4[%c1_11, %c0_12, %c0_13] : memref<2x128x128xf32, #tpu.memory_space<vmem>>, vector<1x128x128xf32>
    %20 = vector.shape_cast %19 : vector<1x128x128xf32> to vector<128x128xf32>
    %21 = arith.mulf %20, %20 : vector<128x128xf32>
    %22 = arith.addf %14, %21 : vector<128x128xf32>
    %23 = vector.broadcast %18 : f32 to vector<128x128xf32>
    %24 = arith.mulf %23, %20 : vector<128x128xf32>
    %25 = arith.addf %17, %24 : vector<128x128xf32>
    %26 = math.sqrt %22 : vector<128x128xf32>
    %cst_14 = arith.constant 9.99999996E-13 : f32
    %27 = vector.broadcast %cst_14 : f32 to vector<128x128xf32>
    %28 = arith.maximumf %26, %27 : vector<128x128xf32>
    %29 = arith.divf %25, %28 : vector<128x128xf32>
    %c0_15 = arith.constant 0 : index
    %c0_16 = arith.constant 0 : index
    %30 = vector.load %arg6[%c0_15, %c0_16] : memref<128x128xf32, #tpu.memory_space<vmem>>, vector<128x128xf32>
    tpu.vector_store %arg6[%c0_15, %c0_16], %29 {strides = array<i32>} : memref<128x128xf32, #tpu.memory_space<vmem>>, vector<128x128xf32>,
    %31 = tpu.iota {dimensions = array<i32: 0>} : vector<128x128xi32>
    %c128_i32 = arith.constant 128 : i32
    %32 = arith.muli %arg0, %c128_i32 : i32
    %33 = vector.broadcast %32 : i32 to vector<128x128xi32>
    %34 = arith.addi %31, %33 : vector<128x128xi32>
    %35 = tpu.iota {dimensions = array<i32: 1>} : vector<128x128xi32>
    %c128_i32_17 = arith.constant 128 : i32
    %36 = arith.muli %arg1, %c128_i32_17 : i32
    %37 = vector.broadcast %36 : i32 to vector<128x128xi32>
    %38 = arith.addi %35, %37 : vector<128x128xi32>
    %39 = arith.cmpi eq, %34, %38 : vector<128x128xi32>
    %cst_18 = arith.constant 0.000000e+00 : f32
    %40 = vector.broadcast %cst_18 : f32 to vector<128x128xf32>
    %41 = arith.select %39, %29, %40 : vector<128x128xi1>, vector<128x128xf32>
    %c0_19 = arith.constant 0 : index
    %c0_20 = arith.constant 0 : index
    %42 = vector.load %arg7[%c0_19, %c0_20] : memref<128x1xf32, #tpu.memory_space<vmem>>, vector<128x1xf32>
    %cst_21 = arith.constant dense<0.000000e+00> : vector<128xf32>
    %43 = vector.multi_reduction <add>, %41, %cst_21 [1] : vector<128x128xf32> to vector<128xf32>
    %44 = vector.shape_cast %43 : vector<128xf32> to vector<128x1xf32>
    %45 = arith.addf %42, %44 : vector<128x1xf32>
    %c0_22 = arith.constant 0 : index
    %c0_23 = arith.constant 0 : index
    %46 = vector.load %arg7[%c0_22, %c0_23] : memref<128x1xf32, #tpu.memory_space<vmem>>, vector<128x1xf32>
    tpu.vector_store %arg7[%c0_22, %c0_23], %45 {strides = array<i32>} : memref<128x1xf32, #tpu.memory_space<vmem>>, vector<128x1xf32>,
    %c0_24 = arith.constant 0 : index
    %c0_25 = arith.constant 0 : index
    %47 = vector.load %arg8[%c0_24, %c0_25] : memref<128x1xf32, #tpu.memory_space<vmem>>, vector<128x1xf32>
    %48 = arith.mulf %29, %29 : vector<128x128xf32>
    %cst_26 = arith.constant dense<0.000000e+00> : vector<128xf32>
    %49 = vector.multi_reduction <add>, %48, %cst_26 [1] : vector<128x128xf32> to vector<128xf32>
    %50 = vector.shape_cast %49 : vector<128xf32> to vector<128x1xf32>
    %51 = arith.addf %47, %50 : vector<128x1xf32>
    %c0_27 = arith.constant 0 : index
    %c0_28 = arith.constant 0 : index
    %52 = vector.load %arg8[%c0_27, %c0_28] : memref<128x1xf32, #tpu.memory_space<vmem>>, vector<128x1xf32>
    tpu.vector_store %arg8[%c0_27, %c0_28], %51 {strides = array<i32>} : memref<128x1xf32, #tpu.memory_space<vmem>>, vector<128x1xf32>,
    return
  }
  func.func @transform_0(%arg0: i32, %arg1: i32) -> (i32, i32) {
    %c0_i32 = arith.constant 0 : i32
    %c0_i32_0 = arith.constant 0 : i32
    return %arg0, %c0_i32 : i32, i32
  }
  func.func @transform_1(%arg0: i32, %arg1: i32) -> (i32, i32) {
    %c0_i32 = arith.constant 0 : i32
    %c0_i32_0 = arith.constant 0 : i32
    return %c0_i32, %arg1 : i32, i32
  }
  func.func @transform_2(%arg0: i32, %arg1: i32) -> (i32, i32, i32) {
    %c0_i32 = arith.constant 0 : i32
    %c0_i32_0 = arith.constant 0 : i32
    return %c0_i32, %arg0, %arg1 : i32, i32, i32
  }
  func.func @transform_3(%arg0: i32, %arg1: i32) -> (i32, i32) {
    %c0_i32 = arith.constant 0 : i32
    %c0_i32_0 = arith.constant 0 : i32
    %c0_i32_1 = arith.constant 0 : i32
    return %c0_i32, %c0_i32_0 : i32, i32
  }
  func.func @transform_4(%arg0: i32, %arg1: i32) -> (i32, i32) {
    %c0_i32 = arith.constant 0 : i32
    return %arg0, %arg1 : i32, i32
  }
  func.func @transform_5(%arg0: i32, %arg1: i32) -> (i32, i32) {
    %c0_i32 = arith.constant 0 : i32
    %c0_i32_0 = arith.constant 0 : i32
    return %arg0, %c0_i32 : i32, i32
  }
  func.func @transform_6(%arg0: i32, %arg1: i32) -> (i32, i32) {
    %c0_i32 = arith.constant 0 : i32
    %c0_i32_0 = arith.constant 0 : i32
    return %arg0, %c0_i32 : i32, i32
  }
}

</mosaic_0001>

<llo_original>
// kernel: weight_train2_forward.1
$region0: #{weight_train2_forward.1}
  #allocation0 [shape = 'u32[]', space=smem, size = 0x4, offset = 0x4, fixed_abs, tag = 'smem constant byte address 0x4 - core index']
  #allocation1 [shape = 'u32[144,128]{1,0:T(1,128)}', space=vmem, size = 0x12000, scoped, tag = 'internal scratch']
  %s0 = inlined_call_operand.vmem [shape: f32[256,32], index: 0, kind: input, shape index: {}]
  %s1 = inlined_call_operand.vmem [shape: f32[32,256], index: 1, kind: input, shape index: {}]
  %s2 = inlined_call_operand.vmem [shape: f32[2,256,256], index: 2, kind: input, shape index: {}]
  %s3 = inlined_call_operand.vmem [shape: f32[1,3], index: 3, kind: input, shape index: {}]
  %s4 = inlined_call_operand.vmem [shape: f32[256,256], index: 4, kind: output, shape index: {0}]
  %s5 = inlined_call_operand.vmem [shape: f32[256,1], index: 5, kind: output, shape index: {1}]
  %s6 = inlined_call_operand.vmem [shape: f32[256,1], index: 6, kind: output, shape index: {2}]
  %7 = xla_tuple %s4, %s5, %s6
  %s8 = sld [smem:[#allocation0]]
  $region183: #{weight_train2_forward.1} parent=0
    _
  %s10 = ssub.s32 1, %s8
  %s11 = scalar_select 0, %s10, %s8
  $region1: #{weight_train2_forward.1} parent=0
    #allocation2 [shape = 'u8[32768]{0}', space=vmem, size = 0x8000, scoped, tag = 'input window, operand 1']
    #allocation3 [shape = 'u8[262144]{0}', space=vmem, size = 0x40000, scoped, tag = 'input window, operand 2']
    #allocation4 [shape = 'u8[512]{0}', space=smem, size = 0x200, scoped, tag = 'input window, operand 3, single buffered']
    #allocation5 [shape = 's32[2]{0}', space=sflag, size = 0x8, scoped, tag = 'scoped memory for weight_train2_forward.1']
    #allocation6 [shape = 'u8[131072]{0}', space=vmem, size = 0x20000, scoped, tag = 'output window, operand 0']
    %12 = vsyncpa [#allocation5], 0
    loop: start=0, step=1, limit=6
    $region2: #{weight_train2_forward.1} parent=1 // loop_pre_header
      _
    $region3: #{weight_train2_forward.1} parent=1 // loop_header
      %s14 = sphi 0, %s18
      %p15 = scmp.ge.s32.totalorder %s14, 6
      %s21 = sphi 0, %s33
      %s22 = sphi 0, %s29
      %s23 = sphi 0, %s21
      %s24 = sphi 0, %s22
      %s25 = sphi 0, %s23
      %s26 = sphi 0, %s24
      %s36 = sphi 0, %s38
      %s39 = sphi 0, %s36
      %s40 = sphi 0, %s39
      %s56 = sphi 0, %s40
      %s62 = sphi 0, %s64
      %s65 = sphi 0, %s62
      %s66 = sphi 0, %s65
      %s82 = sphi 0, %s66
      %s90 = sphi 0, %s92
      %s93 = sphi 0, %s90
      %s94 = sphi 0, %s93
      %s110 = sphi 0, %s94
      %s114 = sphi 0, %s114
      %s116 = sphi 0, %s114
      %s117 = sphi 0, %s116
      %s131 = sphi 0, %s117
      %s139 = sphi 0, %s141
      %s142 = sphi 0, %s139
      %s143 = sphi 0, %s142
      %s159 = sphi 0, %s143
      %s165 = sphi 0, %s167
      %s168 = sphi 0, %s165
      %s169 = sphi 0, %s168
      %s185 = sphi 0, %s169
      %s191 = sphi 0, %s193
      %s194 = sphi 0, %s191
      %s195 = sphi 0, %s194
      %s211 = sphi 0, %s195
    $region4: #{weight_train2_forward.1} parent=1 // loop_header_branch
      %17 = sbr.rel (%p15) target = $region8
    $region5: #{weight_train2_forward.1} parent=1 // loop_body
      %s19 = ssub.s32 %s14, 1
      %s20 = ssub.s32 %s14, 2
      %s27 = sadd.s32 1, %s22
      %p28 = scmp.ge.s32.totalorder %s27, 2
      %s29 = scalar_select %p28, 0, %s27
      %s30 = sadd.s32 1, %s21
      %s31 = scalar_select %p28, %s30, %s21
      %p32 = scmp.ge.s32.totalorder %s31, 2
      %s33 = scalar_select %p32, 0, %s31
      %s34 = ssub.s32 %s21, %s33
      %p35 = scmp.eq.s32.totalorder %s34, 0
      %s37 = sadd.s32 %s36, 1
      %s38 = scalar_select %p35, %s36, %s37
      %p41 = pneg %p35
      %p42 = scmp.eq.s32.totalorder %s14, 3
      %p43 = por %p41, %p42
      %p44 = scmp.ne.s32.totalorder %s36, %s39
      %p45 = scmp.eq.s32.totalorder %s14, 0
      %p46 = por %p44, %p45
      %p47 = scmp.ne.s32.totalorder %s36, %s39
      %p48 = scmp.eq.s32.totalorder %s19, 3
      %p49 = por %p47, %p48
      %p50 = scmp.ne.s32.totalorder %s39, %s40
      %p51 = scmp.eq.s32.totalorder %s19, 0
      %p52 = por %p50, %p51
      %p53 = scmp.ne.s32.totalorder %s39, %s40
      %p54 = scmp.eq.s32.totalorder %s20, 3
      %p55 = por %p53, %p54
      %p57 = scmp.ne.s32.totalorder %s40, %s56
      %p58 = scmp.eq.s32.totalorder %s20, 0
      %p59 = por %p57, %p58
      %s60 = ssub.s32 %s22, %s29
      %p61 = scmp.eq.s32.totalorder %s60, 0
      %s63 = sadd.s32 %s62, 1
      %s64 = scalar_select %p61, %s62, %s63
      %p67 = pneg %p61
      %p68 = scmp.eq.s32.totalorder %s14, 3
      %p69 = por %p67, %p68
      %p70 = scmp.ne.s32.totalorder %s62, %s65
      %p71 = scmp.eq.s32.totalorder %s14, 0
      %p72 = por %p70, %p71
      %p73 = scmp.ne.s32.totalorder %s62, %s65
      %p74 = scmp.eq.s32.totalorder %s19, 3
      %p75 = por %p73, %p74
      %p76 = scmp.ne.s32.totalorder %s65, %s66
      %p77 = scmp.eq.s32.totalorder %s19, 0
      %p78 = por %p76, %p77
      %p79 = scmp.ne.s32.totalorder %s65, %s66
      %p80 = scmp.eq.s32.totalorder %s20, 3
      %p81 = por %p79, %p80
      %p83 = scmp.ne.s32.totalorder %s66, %s82
      %p84 = scmp.eq.s32.totalorder %s20, 0
      %p85 = por %p83, %p84
      %s86 = ssub.s32 %s21, %s33
      %s87 = ssub.s32 %s22, %s29
      %s88 = sor.u32 %s86, %s87
      %p89 = scmp.eq.s32.totalorder %s88, 0
      %s91 = sadd.s32 %s90, 1
      %s92 = scalar_select %p89, %s90, %s91
      %p95 = pneg %p89
      %p96 = scmp.eq.s32.totalorder %s14, 3
      %p97 = por %p95, %p96
      %p98 = scmp.ne.s32.totalorder %s90, %s93
      %p99 = scmp.eq.s32.totalorder %s14, 0
      %p100 = por %p98, %p99
      %p101 = scmp.ne.s32.totalorder %s90, %s93
      %p102 = scmp.eq.s32.totalorder %s19, 3
      %p103 = por %p101, %p102
      %p104 = scmp.ne.s32.totalorder %s93, %s94
      %p105 = scmp.eq.s32.totalorder %s19, 0
      %p106 = por %p104, %p105
      %p107 = scmp.ne.s32.totalorder %s93, %s94
      %p108 = scmp.eq.s32.totalorder %s20, 3
      %p109 = por %p107, %p108
      %p111 = scmp.ne.s32.totalorder %s94, %s110
      %p112 = scmp.eq.s32.totalorder %s20, 0
      %p113 = por %p111, %p112
      %s115 = sadd.s32 %s114, 1
      %p118 = scmp.eq.s32.totalorder %s14, 3
      %p119 = scmp.ne.s32.totalorder %s114, %s116
      %p120 = scmp.eq.s32.totalorder %s14, 0
      %p121 = por %p119, %p120
      %p122 = scmp.ne.s32.totalorder %s114, %s116
      %p123 = scmp.eq.s32.totalorder %s19, 3
      %p124 = por %p122, %p123
      %p125 = scmp.ne.s32.totalorder %s116, %s117
      %p126 = scmp.eq.s32.totalorder %s19, 0
      %p127 = por %p125, %p126
      %p128 = scmp.ne.s32.totalorder %s116, %s117
      %p129 = scmp.eq.s32.totalorder %s20, 3
      %p130 = por %p128, %p129
      %p132 = scmp.ne.s32.totalorder %s117, %s131
      %p133 = scmp.eq.s32.totalorder %s20, 0
      %p134 = por %p132, %p133
      %s135 = ssub.s32 %s21, %s33
      %s136 = ssub.s32 %s22, %s29
      %s137 = sor.u32 %s135, %s136
      %p138 = scmp.eq.s32.totalorder %s137, 0
      %s140 = sadd.s32 %s139, 1
      %s141 = scalar_select %p138, %s139, %s140
      %p144 = pneg %p138
      %p145 = scmp.eq.s32.totalorder %s14, 3
      %p146 = por %p144, %p145
      %p147 = scmp.ne.s32.totalorder %s139, %s142
      %p148 = scmp.eq.s32.totalorder %s14, 0
      %p149 = por %p147, %p148
      %p150 = scmp.ne.s32.totalorder %s139, %s142
      %p151 = scmp.eq.s32.totalorder %s19, 3
      %p152 = por %p150, %p151
      %p153 = scmp.ne.s32.totalorder %s142, %s143
      %p154 = scmp.eq.s32.totalorder %s19, 0
      %p155 = por %p153, %p154
      %p156 = scmp.ne.s32.totalorder %s142, %s143
      %p157 = scmp.eq.s32.totalorder %s20, 3
      %p158 = por %p156, %p157
      %p160 = scmp.ne.s32.totalorder %s143, %s159
      %p161 = scmp.eq.s32.totalorder %s20, 0
      %p162 = por %p160, %p161
      %s163 = ssub.s32 %s21, %s33
      %p164 = scmp.eq.s32.totalorder %s163, 0
      %s166 = sadd.s32 %s165, 1
      %s167 = scalar_select %p164, %s165, %s166
      %p170 = pneg %p164
      %p171 = scmp.eq.s32.totalorder %s14, 3
      %p172 = por %p170, %p171
      %p173 = scmp.ne.s32.totalorder %s165, %s168
      %p174 = scmp.eq.s32.totalorder %s14, 0
      %p175 = por %p173, %p174
      %p176 = scmp.ne.s32.totalorder %s165, %s168
      %p177 = scmp.eq.s32.totalorder %s19, 3
      %p178 = por %p176, %p177
      %p179 = scmp.ne.s32.totalorder %s168, %s169
      %p180 = scmp.eq.s32.totalorder %s19, 0
      %p181 = por %p179, %p180
      %p182 = scmp.ne.s32.totalorder %s168, %s169
      %p183 = scmp.eq.s32.totalorder %s20, 3
      %p184 = por %p182, %p183
      %p186 = scmp.ne.s32.totalorder %s169, %s185
      %p187 = scmp.eq.s32.totalorder %s20, 0
      %p188 = por %p186, %p187
      %s189 = ssub.s32 %s21, %s33
      %p190 = scmp.eq.s32.totalorder %s189, 0
      %s192 = sadd.s32 %s191, 1
      %s193 = scalar_select %p190, %s191, %s192
      %p196 = pneg %p190
      %p197 = scmp.eq.s32.totalorder %s14, 3
      %p198 = por %p196, %p197
      %p199 = scmp.ne.s32.totalorder %s191, %s194
      %p200 = scmp.eq.s32.totalorder %s14, 0
      %p201 = por %p199, %p200
      %p202 = scmp.ne.s32.totalorder %s191, %s194
      %p203 = scmp.eq.s32.totalorder %s19, 3
      %p204 = por %p202, %p203
      %p205 = scmp.ne.s32.totalorder %s194, %s195
      %p206 = scmp.eq.s32.totalorder %s19, 0
      %p207 = por %p205, %p206
      %p208 = scmp.ne.s32.totalorder %s194, %s195
      %p209 = scmp.eq.s32.totalorder %s20, 3
      %p210 = por %p208, %p209
      %p212 = scmp.ne.s32.totalorder %s195, %s211
      %p213 = scmp.eq.s32.totalorder %s20, 0
      %p214 = por %p212, %p213
      %p215 = scmp.le.s32.totalorder 1, %s14
      %p216 = scmp.lt.s32.totalorder %s14, 5
      %p217 = pnand %p215, %p216
      %p218 = pneg %p217
      // Predicated region
      $region9: #{weight_train2_forward.1} parent=5 // pred_check
        _
      $region10: #{weight_train2_forward.1} parent=5 // pred_check_branch
        %220 = sbr.rel (%p217) target = $region12
      $region11: #{weight_train2_forward.1} parent=5 // pred_region
        %s221 = ssub.s32 %s14, 1
        // Predicated region
        $region13: #{weight_train2_forward.1} parent=11 // pred_check
          %p222 = pneg %p127
        $region14: #{weight_train2_forward.1} parent=11 // pred_check_branch
          %224 = sbr.rel (%p222) target = $region16
        $region15: #{weight_train2_forward.1} parent=11 // pred_region
          %s226 = ssub.s32 16, 16
          %227 = vsyncadd [#allocation5], %s226
          %s229 = sshll.u32 %s3, 4
          %s230 = int_to_ptr.vmem [resolvable:$true] %s229
          %232 = dma.vmem_to_smem %s230, 16, [#allocation4], [#allocation5]
        $region16: #{weight_train2_forward.1} parent=11 // pred_fallthru
          _
      $region12: #{weight_train2_forward.1} parent=5 // pred_fallthru
        _
      %p233 = scmp.lt.s32.totalorder %s14, 4
      // Predicated region
      $region17: #{weight_train2_forward.1} parent=5 // pred_check
        %p234 = pneg %p233
      $region18: #{weight_train2_forward.1} parent=5 // pred_check_branch
        %236 = sbr.rel (%p234) target = $region20
      $region19: #{weight_train2_forward.1} parent=5 // pred_region
        // Predicated region
        $region21: #{weight_train2_forward.1} parent=19 // pred_check
          %p237 = pneg %p46
        $region22: #{weight_train2_forward.1} parent=19 // pred_check_branch
          %239 = sbr.rel (%p237) target = $region24
        $region23: #{weight_train2_forward.1} parent=19 // pred_region
          %s240 = smul.u32 16, %s21
          %p241 = scmp.lt.s32.totalorder %s240, 31
          %s242 = scalar_select %p241, %s240, 31
          %s243 = smul.addr %s242, 8
          %s244 = scalar_lea.vmem %s0, %s243
          %s245 = smul.u32 16, %s21
        $region24: #{weight_train2_forward.1} parent=19 // pred_fallthru
          _
        // Predicated region
        $region25: #{weight_train2_forward.1} parent=19 // pred_check
          %p246 = pneg %p72
        $region26: #{weight_train2_forward.1} parent=19 // pred_check_branch
          %248 = sbr.rel (%p246) target = $region28
        $region27: #{weight_train2_forward.1} parent=19 // pred_region
          %s249 = sand.u32 %s62, 1
          %s250 = sand.u32 %s62, 1
          %s251 = smul.addr %s250, 32
          %s252 = scalar_lea.vmem [#allocation2], %s251
          %s253 = smul.addr %s22, 8
          %s254 = scalar_lea.vmem %s1, %s253
          // Predicated region
          $region29: #{weight_train2_forward.1} parent=27 // pred_check
            _
          $region30: #{weight_train2_forward.1} parent=27 // pred_check_branch
            %256 = sbr.rel (0) target = $region32
          $region31: #{weight_train2_forward.1} parent=27 // pred_region
            // Predicated region
            $region33: #{weight_train2_forward.1} parent=31 // pred_check
              _
            $region34: #{weight_train2_forward.1} parent=31 // pred_check_branch
              %258 = sbr.rel (0) target = $region36
            $region35: #{weight_train2_forward.1} parent=31 // pred_region
              // Predicated region
              $region48: #{weight_train2_forward.1} parent=35 // pred_check
                _
              $region49: #{weight_train2_forward.1} parent=35 // pred_check_branch
                %279 = sbr.rel (0) target = $region51
              $region50: #{weight_train2_forward.1} parent=35 // pred_region
                loop: start=0, step=1, limit=1
                $region52: #{weight_train2_forward.1} parent=50 // loop_pre_header
                  _
                $region53: #{weight_train2_forward.1} parent=50 // loop_header
                  %s281 = sphi 0, %s285
                  %p282 = scmp.ge.s32.totalorder %s281, 1
                  %s286 = sphi %s254, %s254
                  %s287 = sphi %s252, %s252
                $region54: #{weight_train2_forward.1} parent=50 // loop_header_branch
                  %284 = sbr.rel (%p282) target = $region58
                $region55: #{weight_train2_forward.1} parent=50 // loop_body
                  %v288 = vld [vmem:[%s286] sm:$0xff]
                  %289 = vst [vmem:[%s287] sm:$0xff] %v288
                  %v290 = vld [vmem:[%s286 + $0x10] sm:$0xff]
                  %291 = vst [vmem:[%s287 + $0x8] sm:$0xff] %v290
                  %v292 = vld [vmem:[%s286 + $0x20] sm:$0xff]
                  %293 = vst [vmem:[%s287 + $0x10] sm:$0xff] %v292
                  %v294 = vld [vmem:[%s286 + $0x30] sm:$0xff]
                  %295 = vst [vmem:[%s287 + $0x18] sm:$0xff] %v294
                $region56: #{weight_train2_forward.1} parent=50 // loop_footer
                  %s285 = sadd.s32 1, %s281
                $region57: #{weight_train2_forward.1} parent=50 // loop_footer_branch
                  %280 = sbr.rel target = $region53
                $region58: #{weight_train2_forward.1} parent=50 // loop_exit
                  _
              $region51: #{weight_train2_forward.1} parent=35 // pred_fallthru
                _
              // Predicated region
              $region59: #{weight_train2_forward.1} parent=35 // pred_check
                _
              $region60: #{weight_train2_forward.1} parent=35 // pred_check_branch
                %297 = sbr.rel target = $region62
              $region61: #{weight_train2_forward.1} parent=35 // pred_region
                _
              $region62: #{weight_train2_forward.1} parent=35 // pred_fallthru
                _
            $region36: #{weight_train2_forward.1} parent=31 // pred_fallthru
              _
            // Predicated region
            $region37: #{weight_train2_forward.1} parent=31 // pred_check
              _
            $region38: #{weight_train2_forward.1} parent=31 // pred_check_branch
              %260 = sbr.rel target = $region40
            $region39: #{weight_train2_forward.1} parent=31 // pred_region
              loop: start=0, step=1, limit=1
              $region41: #{weight_train2_forward.1} parent=39 // loop_pre_header
                _
              $region42: #{weight_train2_forward.1} parent=39 // loop_header
                %s263 = sphi 0, %s267
                %p264 = scmp.ge.s32.totalorder %s263, 1
                %s268 = sphi %s254, %s254
                %s269 = sphi %s252, %s252
              $region43: #{weight_train2_forward.1} parent=39 // loop_header_branch
                %266 = sbr.rel (%p264) target = $region47
              $region44: #{weight_train2_forward.1} parent=39 // loop_body
                %v270 = vld [vmem:[%s268] sm:$0xff]
                %271 = vst [vmem:[%s269] sm:$0xff] %v270
                %v272 = vld [vmem:[%s268 + $0x10] sm:$0xff]
                %273 = vst [vmem:[%s269 + $0x8] sm:$0xff] %v272
                %v274 = vld [vmem:[%s268 + $0x20] sm:$0xff]
                %275 = vst [vmem:[%s269 + $0x10] sm:$0xff] %v274
                %v276 = vld [vmem:[%s268 + $0x30] sm:$0xff]
                %277 = vst [vmem:[%s269 + $0x18] sm:$0xff] %v276
              $region45: #{weight_train2_forward.1} parent=39 // loop_footer
                %s267 = sadd.s32 1, %s263
              $region46: #{weight_train2_forward.1} parent=39 // loop_footer_branch
                %262 = sbr.rel target = $region42
              $region47: #{weight_train2_forward.1} parent=39 // loop_exit
                _
            $region40: #{weight_train2_forward.1} parent=31 // pred_fallthru
              _
          $region32: #{weight_train2_forward.1} parent=27 // pred_fallthru
            _
          %298 = vnop
        $region28: #{weight_train2_forward.1} parent=19 // pred_fallthru
          _
        // Predicated region
        $region63: #{weight_train2_forward.1} parent=19 // pred_check
          %p299 = pneg %p100
        $region64: #{weight_train2_forward.1} parent=19 // pred_check_branch
          %301 = sbr.rel (%p299) target = $region66
        $region65: #{weight_train2_forward.1} parent=19 // pred_region
          %s302 = sand.u32 %s90, 1
          %s303 = sand.u32 %s90, 1
          %s304 = smul.addr %s303, 256
          %s305 = scalar_lea.vmem [#allocation3], %s304
          %s306 = smul.u32 16, %s21
          %s307 = smul.addr %s306, 2
          %s308 = sadd.s32 %s22, %s307
          %s309 = smul.addr %s308, 8
          %s310 = scalar_lea.vmem %s2, %s309
          // Predicated region
          $region67: #{weight_train2_forward.1} parent=65 // pred_check
            _
          $region68: #{weight_train2_forward.1} parent=65 // pred_check_branch
            %312 = sbr.rel (0) target = $region70
          $region69: #{weight_train2_forward.1} parent=65 // pred_region
            // Predicated region
            $region71: #{weight_train2_forward.1} parent=69 // pred_check
              _
            $region72: #{weight_train2_forward.1} parent=69 // pred_check_branch
              %314 = sbr.rel (0) target = $region74
            $region73: #{weight_train2_forward.1} parent=69 // pred_region
              // Predicated region
              $region86: #{weight_train2_forward.1} parent=73 // pred_check
                _
              $region87: #{weight_train2_forward.1} parent=73 // pred_check_branch
                %391 = sbr.rel (0) target = $region89
              $region88: #{weight_train2_forward.1} parent=73 // pred_region
                loop: start=0, step=1, limit=1
                $region90: #{weight_train2_forward.1} parent=88 // loop_pre_header
                  _
                $region91: #{weight_train2_forward.1} parent=88 // loop_header
                  %s393 = sphi 0, %s397
                  %p394 = scmp.ge.s32.totalorder %s393, 1
                  %s398 = sphi %s310, %s310
                  %s399 = sphi %s305, %s305
                $region92: #{weight_train2_forward.1} parent=88 // loop_header_branch
                  %396 = sbr.rel (%p394) target = $region96
                $region93: #{weight_train2_forward.1} parent=88 // loop_body
                  %v400 = vld [vmem:[%s398] sm:$0xff]
                  %401 = vst [vmem:[%s399] sm:$0xff] %v400
                  %v402 = vld [vmem:[%s398 + $0x10] sm:$0xff]
                  %403 = vst [vmem:[%s399 + $0x8] sm:$0xff] %v402
                  %v404 = vld [vmem:[%s398 + $0x20] sm:$0xff]
                  %405 = vst [vmem:[%s399 + $0x10] sm:$0xff] %v404
                  %v406 = vld [vmem:[%s398 + $0x30] sm:$0xff]
                  %407 = vst [vmem:[%s399 + $0x18] sm:$0xff] %v406
                  %v408 = vld [vmem:[%s398 + $0x40] sm:$0xff]
                  %409 = vst [vmem:[%s399 + $0x20] sm:$0xff] %v408
                  %v410 = vld [vmem:[%s398 + $0x50] sm:$0xff]
                  %411 = vst [vmem:[%s399 + $0x28] sm:$0xff] %v410
                  %v412 = vld [vmem:[%s398 + $0x60] sm:$0xff]
                  %413 = vst [vmem:[%s399 + $0x30] sm:$0xff] %v412
                  %v414 = vld [vmem:[%s398 + $0x70] sm:$0xff]
                  %415 = vst [vmem:[%s399 + $0x38] sm:$0xff] %v414
                  %v416 = vld [vmem:[%s398 + $0x80] sm:$0xff]
                  %417 = vst [vmem:[%s399 + $0x40] sm:$0xff] %v416
                  %v418 = vld [vmem:[%s398 + $0x90] sm:$0xff]
                  %419 = vst [vmem:[%s399 + $0x48] sm:$0xff] %v418
                  %v420 = vld [vmem:[%s398 + $0xa0] sm:$0xff]
                  %421 = vst [vmem:[%s399 + $0x50] sm:$0xff] %v420
                  %v422 = vld [vmem:[%s398 + $0xb0] sm:$0xff]
                  %423 = vst [vmem:[%s399 + $0x58] sm:$0xff] %v422
                  %v424 = vld [vmem:[%s398 + $0xc0] sm:$0xff]
                  %425 = vst [vmem:[%s399 + $0x60] sm:$0xff] %v424
                  %v426 = vld [vmem:[%s398 + $0xd0] sm:$0xff]
                  %427 = vst [vmem:[%s399 + $0x68] sm:$0xff] %v426
                  %v428 = vld [vmem:[%s398 + $0xe0] sm:$0xff]
                  %429 = vst [vmem:[%s399 + $0x70] sm:$0xff] %v428
                  %v430 = vld [vmem:[%s398 + $0xf0] sm:$0xff]
                  %431 = vst [vmem:[%s399 + $0x78] sm:$0xff] %v430
                  %v432 = vld [vmem:[%s398 + $0x200] sm:$0xff]
                  %433 = vst [vmem:[%s399 + $0x80] sm:$0xff] %v432
                  %v434 = vld [vmem:[%s398 + $0x210] sm:$0xff]
                  %435 = vst [vmem:[%s399 + $0x88] sm:$0xff] %v434
                  %v436 = vld [vmem:[%s398 + $0x220] sm:$0xff]
                  %437 = vst [vmem:[%s399 + $0x90] sm:$0xff] %v436
                  %v438 = vld [vmem:[%s398 + $0x230] sm:$0xff]
                  %439 = vst [vmem:[%s399 + $0x98] sm:$0xff] %v438
                  %v440 = vld [vmem:[%s398 + $0x240] sm:$0xff]
                  %441 = vst [vmem:[%s399 + $0xa0] sm:$0xff] %v440
                  %v442 = vld [vmem:[%s398 + $0x250] sm:$0xff]
                  %443 = vst [vmem:[%s399 + $0xa8] sm:$0xff] %v442
                  %v444 = vld [vmem:[%s398 + $0x260] sm:$0xff]
                  %445 = vst [vmem:[%s399 + $0xb0] sm:$0xff] %v444
                  %v446 = vld [vmem:[%s398 + $0x270] sm:$0xff]
                  %447 = vst [vmem:[%s399 + $0xb8] sm:$0xff] %v446
                  %v448 = vld [vmem:[%s398 + $0x280] sm:$0xff]
                  %449 = vst [vmem:[%s399 + $0xc0] sm:$0xff] %v448
                  %v450 = vld [vmem:[%s398 + $0x290] sm:$0xff]
                  %451 = vst [vmem:[%s399 + $0xc8] sm:$0xff] %v450
                  %v452 = vld [vmem:[%s398 + $0x2a0] sm:$0xff]
                  %453 = vst [vmem:[%s399 + $0xd0] sm:$0xff] %v452
                  %v454 = vld [vmem:[%s398 + $0x2b0] sm:$0xff]
                  %455 = vst [vmem:[%s399 + $0xd8] sm:$0xff] %v454
                  %v456 = vld [vmem:[%s398 + $0x2c0] sm:$0xff]
                  %457 = vst [vmem:[%s399 + $0xe0] sm:$0xff] %v456
                  %v458 = vld [vmem:[%s398 + $0x2d0] sm:$0xff]
                  %459 = vst [vmem:[%s399 + $0xe8] sm:$0xff] %v458
                  %v460 = vld [vmem:[%s398 + $0x2e0] sm:$0xff]
                  %461 = vst [vmem:[%s399 + $0xf0] sm:$0xff] %v460
                  %v462 = vld [vmem:[%s398 + $0x2f0] sm:$0xff]
                  %463 = vst [vmem:[%s399 + $0xf8] sm:$0xff] %v462
                $region94: #{weight_train2_forward.1} parent=88 // loop_footer
                  %s397 = sadd.s32 1, %s393
                $region95: #{weight_train2_forward.1} parent=88 // loop_footer_branch
                  %392 = sbr.rel target = $region91
                $region96: #{weight_train2_forward.1} parent=88 // loop_exit
                  _
              $region89: #{weight_train2_forward.1} parent=73 // pred_fallthru
                _
              // Predicated region
              $region97: #{weight_train2_forward.1} parent=73 // pred_check
                _
              $region98: #{weight_train2_forward.1} parent=73 // pred_check_branch
                %465 = sbr.rel target = $region100
              $region99: #{weight_train2_forward.1} parent=73 // pred_region
                _
              $region100: #{weight_train2_forward.1} parent=73 // pred_fallthru
                _
            $region74: #{weight_train2_forward.1} parent=69 // pred_fallthru
              _
            // Predicated region
            $region75: #{weight_train2_forward.1} parent=69 // pred_check
              _
            $region76: #{weight_train2_forward.1} parent=69 // pred_check_branch
              %316 = sbr.rel target = $region78
            $region77: #{weight_train2_forward.1} parent=69 // pred_region
              loop: start=0, step=1, limit=1
              $region79: #{weight_train2_forward.1} parent=77 // loop_pre_header
                _
              $region80: #{weight_train2_forward.1} parent=77 // loop_header
                %s319 = sphi 0, %s323
                %p320 = scmp.ge.s32.totalorder %s319, 1
                %s324 = sphi %s310, %s310
                %s325 = sphi %s305, %s305
              $region81: #{weight_train2_forward.1} parent=77 // loop_header_branch
                %322 = sbr.rel (%p320) target = $region85
              $region82: #{weight_train2_forward.1} parent=77 // loop_body
                %v326 = vld [vmem:[%s324] sm:$0xff]
                %327 = vst [vmem:[%s325] sm:$0xff] %v326
                %v328 = vld [vmem:[%s324 + $0x10] sm:$0xff]
                %329 = vst [vmem:[%s325 + $0x8] sm:$0xff] %v328
                %v330 = vld [vmem:[%s324 + $0x20] sm:$0xff]
                %331 = vst [vmem:[%s325 + $0x10] sm:$0xff] %v330
                %v332 = vld [vmem:[%s324 + $0x30] sm:$0xff]
                %333 = vst [vmem:[%s325 + $0x18] sm:$0xff] %v332
                %v334 = vld [vmem:[%s324 + $0x40] sm:$0xff]
                %335 = vst [vmem:[%s325 + $0x20] sm:$0xff] %v334
                %v336 = vld [vmem:[%s324 + $0x50] sm:$0xff]
                %337 = vst [vmem:[%s325 + $0x28] sm:$0xff] %v336
                %v338 = vld [vmem:[%s324 + $0x60] sm:$0xff]
                %339 = vst [vmem:[%s325 + $0x30] sm:$0xff] %v338
                %v340 = vld [vmem:[%s324 + $0x70] sm:$0xff]
                %341 = vst [vmem:[%s325 + $0x38] sm:$0xff] %v340
                %v342 = vld [vmem:[%s324 + $0x80] sm:$0xff]
                %343 = vst [vmem:[%s325 + $0x40] sm:$0xff] %v342
                %v344 = vld [vmem:[%s324 + $0x90] sm:$0xff]
                %345 = vst [vmem:[%s325 + $0x48] sm:$0xff] %v344
                %v346 = vld [vmem:[%s324 + $0xa0] sm:$0xff]
                %347 = vst [vmem:[%s325 + $0x50] sm:$0xff] %v346
                %v348 = vld [vmem:[%s324 + $0xb0] sm:$0xff]
                %349 = vst [vmem:[%s325 + $0x58] sm:$0xff] %v348
                %v350 = vld [vmem:[%s324 + $0xc0] sm:$0xff]
                %351 = vst [vmem:[%s325 + $0x60] sm:$0xff] %v350
                %v352 = vld [vmem:[%s324 + $0xd0] sm:$0xff]
                %353 = vst [vmem:[%s325 + $0x68] sm:$0xff] %v352
                %v354 = vld [vmem:[%s324 + $0xe0] sm:$0xff]
                %355 = vst [vmem:[%s325 + $0x70] sm:$0xff] %v354
                %v356 = vld [vmem:[%s324 + $0xf0] sm:$0xff]
                %357 = vst [vmem:[%s325 + $0x78] sm:$0xff] %v356
                %v358 = vld [vmem:[%s324 + $0x200] sm:$0xff]
                %359 = vst [vmem:[%s325 + $0x80] sm:$0xff] %v358
                %v360 = vld [vmem:[%s324 + $0x210] sm:$0xff]
                %361 = vst [vmem:[%s325 + $0x88] sm:$0xff] %v360
                %v362 = vld [vmem:[%s324 + $0x220] sm:$0xff]
                %363 = vst [vmem:[%s325 + $0x90] sm:$0xff] %v362
                %v364 = vld [vmem:[%s324 + $0x230] sm:$0xff]
                %365 = vst [vmem:[%s325 + $0x98] sm:$0xff] %v364
                %v366 = vld [vmem:[%s324 + $0x240] sm:$0xff]
                %367 = vst [vmem:[%s325 + $0xa0] sm:$0xff] %v366
                %v368 = vld [vmem:[%s324 + $0x250] sm:$0xff]
                %369 = vst [vmem:[%s325 + $0xa8] sm:$0xff] %v368
                %v370 = vld [vmem:[%s324 + $0x260] sm:$0xff]
                %371 = vst [vmem:[%s325 + $0xb0] sm:$0xff] %v370
                %v372 = vld [vmem:[%s324 + $0x270] sm:$0xff]
                %373 = vst [vmem:[%s325 + $0xb8] sm:$0xff] %v372
                %v374 = vld [vmem:[%s324 + $0x280] sm:$0xff]
                %375 = vst [vmem:[%s325 + $0xc0] sm:$0xff] %v374
                %v376 = vld [vmem:[%s324 + $0x290] sm:$0xff]
                %377 = vst [vmem:[%s325 + $0xc8] sm:$0xff] %v376
                %v378 = vld [vmem:[%s324 + $0x2a0] sm:$0xff]
                %379 = vst [vmem:[%s325 + $0xd0] sm:$0xff] %v378
                %v380 = vld [vmem:[%s324 + $0x2b0] sm:$0xff]
                %381 = vst [vmem:[%s325 + $0xd8] sm:$0xff] %v380
                %v382 = vld [vmem:[%s324 + $0x2c0] sm:$0xff]
                %383 = vst [vmem:[%s325 + $0xe0] sm:$0xff] %v382
                %v384 = vld [vmem:[%s324 + $0x2d0] sm:$0xff]
                %385 = vst [vmem:[%s325 + $0xe8] sm:$0xff] %v384
                %v386 = vld [vmem:[%s324 + $0x2e0] sm:$0xff]
                %387 = vst [vmem:[%s325 + $0xf0] sm:$0xff] %v386
                %v388 = vld [vmem:[%s324 + $0x2f0] sm:$0xff]
                %389 = vst [vmem:[%s325 + $0xf8] sm:$0xff] %v388
              $region83: #{weight_train2_forward.1} parent=77 // loop_footer
                %s323 = sadd.s32 1, %s319
              $region84: #{weight_train2_forward.1} parent=77 // loop_footer_branch
                %318 = sbr.rel target = $region80
              $region85: #{weight_train2_forward.1} parent=77 // loop_exit
                _
            $region78: #{weight_train2_forward.1} parent=69 // pred_fallthru
              _
          $region70: #{weight_train2_forward.1} parent=65 // pred_fallthru
            _
          %466 = vnop
        $region66: #{weight_train2_forward.1} parent=19 // pred_fallthru
          _
      $region20: #{weight_train2_forward.1} parent=5 // pred_fallthru
        _
      %p467 = scmp.le.s32.totalorder 1, %s14
      %p468 = scmp.lt.s32.totalorder %s14, 5
      %p469 = pnand %p467, %p468
      %p470 = pneg %p469
      // Predicated region
      $region101: #{weight_train2_forward.1} parent=5 // pred_check
        _
      $region102: #{weight_train2_forward.1} parent=5 // pred_check_branch
        %472 = sbr.rel (%p469) target = $region104
      $region103: #{weight_train2_forward.1} parent=5 // pred_region
        %s473 = ssub.s32 %s14, 1
        %s474 = sand.u32 %s65, 1
        %s475 = sand.u32 %s65, 1
        %s476 = smul.addr %s475, 32
        %s477 = scalar_lea.vmem [#allocation2], %s476
        // Predicated region
        $region105: #{weight_train2_forward.1} parent=103 // pred_check
          %p478 = pneg %p78
        $region106: #{weight_train2_forward.1} parent=103 // pred_check_branch
          %480 = sbr.rel (%p478) target = $region108
        $region107: #{weight_train2_forward.1} parent=103 // pred_region
          _
        $region108: #{weight_train2_forward.1} parent=103 // pred_fallthru
          _
        %s481 = sand.u32 %s93, 1
        %s482 = sand.u32 %s93, 1
        %s483 = smul.addr %s482, 256
        %s484 = scalar_lea.vmem [#allocation3], %s483
        // Predicated region
        $region109: #{weight_train2_forward.1} parent=103 // pred_check
          %p485 = pneg %p106
        $region110: #{weight_train2_forward.1} parent=103 // pred_check_branch
          %487 = sbr.rel (%p485) target = $region112
        $region111: #{weight_train2_forward.1} parent=103 // pred_region
          _
        $region112: #{weight_train2_forward.1} parent=103 // pred_fallthru
          _
        // Predicated region
        $region113: #{weight_train2_forward.1} parent=103 // pred_check
          %p488 = pneg %p127
        $region114: #{weight_train2_forward.1} parent=103 // pred_check_branch
          %490 = sbr.rel (%p488) target = $region116
        $region115: #{weight_train2_forward.1} parent=103 // pred_region
          %491 = dma.done [#allocation5], 16
        $region116: #{weight_train2_forward.1} parent=103 // pred_fallthru
          _
        %492 = sfence
        %s493 = smul.u32 16, %s23
        %p494 = scmp.lt.s32.totalorder %s493, 31
        %s495 = scalar_select %p494, %s493, 31
        %s496 = smul.addr %s495, 8
        %s497 = scalar_lea.vmem %s0, %s496
        %p498 = pneg %p52
        %p499 = pneg %p49
        %s500 = sand.u32 %s65, 1
        %s501 = sand.u32 %s65, 1
        %s502 = smul.addr %s501, 32
        %s503 = scalar_lea.vmem [#allocation2], %s502
        %p504 = pneg %p78
        %p505 = pneg %p75
        %s506 = sand.u32 %s93, 1
        %s507 = sand.u32 %s93, 1
        %s508 = smul.addr %s507, 256
        %s509 = scalar_lea.vmem [#allocation3], %s508
        %p510 = pneg %p106
        %p511 = pneg %p103
        %p512 = pneg %p127
        %p513 = pneg %p124
        %p514 = pneg %p155
        %p515 = pneg %p152
        %s516 = sand.u32 %s142, 1
        %s517 = sand.u32 %s142, 1
        %s518 = smul.addr %s517, 128
        %s519 = scalar_lea.vmem [#allocation6], %s518
        %p520 = pneg %p181
        %p521 = pneg %p178
        %s522 = smul.u32 16, %s23
        %p523 = scmp.lt.s32.totalorder %s522, 31
        %s524 = scalar_select %p523, %s522, 31
        %s525 = smul.addr %s524, 8
        %s526 = scalar_lea.vmem %s5, %s525
        %p527 = pneg %p207
        %p528 = pneg %p204
        %s529 = smul.u32 16, %s23
        %p530 = scmp.lt.s32.totalorder %s529, 31
        %s531 = scalar_select %p530, %s529, 31
        %s532 = smul.addr %s531, 8
        %s533 = scalar_lea.vmem %s6, %s532
        %s534 = smul.u32 16, %s23
        %p535 = scmp.lt.s32.totalorder %s534, 31
        %s536 = scalar_select %p535, %s534, 31
        %s537 = smul.addr %s536, 8
        %s538 = scalar_lea.vmem %s0, %s537
        %s539 = smul.u32 16, %s23
        %s540 = smul.u32 16, %s23
        %s541 = smul.u32 16, %s23
        %s542 = smul.u32 16, %s23
        %p543 = scmp.lt.s32.totalorder %s542, 31
        %s544 = scalar_select %p543, %s542, 31
        %s545 = smul.addr %s544, 8
        %s546 = scalar_lea.vmem %s5, %s545
        %s547 = smul.u32 16, %s23
        %s548 = smul.u32 16, %s23
        %p549 = scmp.lt.s32.totalorder %s548, 31
        %s550 = scalar_select %p549, %s548, 31
        %s551 = smul.addr %s550, 8
        %s552 = scalar_lea.vmem %s6, %s551
        %s553 = smul.u32 16, %s23
        %p554 = scmp.eq.s32.totalorder %s24, 0
        // Predicated region
        $region117: #{weight_train2_forward.1} parent=103 // pred_check
          %p555 = pneg %p554
        $region118: #{weight_train2_forward.1} parent=103 // pred_check_branch
          %557 = sbr.rel (%p555) target = $region120
        $region119: #{weight_train2_forward.1} parent=103 // pred_region
          %vm558 = vcmask 7168
          %559 = vst.msk [vmem:[%s546] sm:$0xff] %vm558, 0.0
          %560 = vst.msk [vmem:[%s546 + $0x8] sm:$0xff] %vm558, 0.0
          %561 = vst.msk [vmem:[%s546 + $0x10] sm:$0xff] %vm558, 0.0
          %562 = vst.msk [vmem:[%s546 + $0x18] sm:$0xff] %vm558, 0.0
          %563 = vst.msk [vmem:[%s546 + $0x20] sm:$0xff] %vm558, 0.0
          %564 = vst.msk [vmem:[%s546 + $0x28] sm:$0xff] %vm558, 0.0
          %565 = vst.msk [vmem:[%s546 + $0x30] sm:$0xff] %vm558, 0.0
          %566 = vst.msk [vmem:[%s546 + $0x38] sm:$0xff] %vm558, 0.0
          %567 = vst.msk [vmem:[%s546 + $0x40] sm:$0xff] %vm558, 0.0
          %568 = vst.msk [vmem:[%s546 + $0x48] sm:$0xff] %vm558, 0.0
          %569 = vst.msk [vmem:[%s546 + $0x50] sm:$0xff] %vm558, 0.0
          %570 = vst.msk [vmem:[%s546 + $0x58] sm:$0xff] %vm558, 0.0
          %571 = vst.msk [vmem:[%s546 + $0x60] sm:$0xff] %vm558, 0.0
          %572 = vst.msk [vmem:[%s546 + $0x68] sm:$0xff] %vm558, 0.0
          %573 = vst.msk [vmem:[%s546 + $0x70] sm:$0xff] %vm558, 0.0
          %574 = vst.msk [vmem:[%s546 + $0x78] sm:$0xff] %vm558, 0.0
          %575 = vst.msk [vmem:[%s552] sm:$0xff] %vm558, 0.0
          %576 = vst.msk [vmem:[%s552 + $0x8] sm:$0xff] %vm558, 0.0
          %577 = vst.msk [vmem:[%s552 + $0x10] sm:$0xff] %vm558, 0.0
          %578 = vst.msk [vmem:[%s552 + $0x18] sm:$0xff] %vm558, 0.0
          %579 = vst.msk [vmem:[%s552 + $0x20] sm:$0xff] %vm558, 0.0
          %580 = vst.msk [vmem:[%s552 + $0x28] sm:$0xff] %vm558, 0.0
          %581 = vst.msk [vmem:[%s552 + $0x30] sm:$0xff] %vm558, 0.0
          %582 = vst.msk [vmem:[%s552 + $0x38] sm:$0xff] %vm558, 0.0
          %583 = vst.msk [vmem:[%s552 + $0x40] sm:$0xff] %vm558, 0.0
          %584 = vst.msk [vmem:[%s552 + $0x48] sm:$0xff] %vm558, 0.0
          %585 = vst.msk [vmem:[%s552 + $0x50] sm:$0xff] %vm558, 0.0
          %586 = vst.msk [vmem:[%s552 + $0x58] sm:$0xff] %vm558, 0.0
          %587 = vst.msk [vmem:[%s552 + $0x60] sm:$0xff] %vm558, 0.0
          %588 = vst.msk [vmem:[%s552 + $0x68] sm:$0xff] %vm558, 0.0
          %589 = vst.msk [vmem:[%s552 + $0x70] sm:$0xff] %vm558, 0.0
          %590 = vst.msk [vmem:[%s552 + $0x78] sm:$0xff] %vm558, 0.0
        $region120: #{weight_train2_forward.1} parent=103 // pred_fallthru
          _
        %v591 = vld [vmem:[%s538] sm:$0xff]
        %v592 = vld [vmem:[%s538 + $0x8] sm:$0xff]
        %v593 = vld [vmem:[%s538 + $0x10] sm:$0xff]
        %v594 = vld [vmem:[%s538 + $0x18] sm:$0xff]
        %v595 = vld [vmem:[%s538 + $0x20] sm:$0xff]
        %v596 = vld [vmem:[%s538 + $0x28] sm:$0xff]
        %v597 = vld [vmem:[%s538 + $0x30] sm:$0xff]
        %v598 = vld [vmem:[%s538 + $0x38] sm:$0xff]
        %v599 = vld [vmem:[%s538 + $0x40] sm:$0xff]
        %v600 = vld [vmem:[%s538 + $0x48] sm:$0xff]
        %v601 = vld [vmem:[%s538 + $0x50] sm:$0xff]
        %v602 = vld [vmem:[%s538 + $0x58] sm:$0xff]
        %v603 = vld [vmem:[%s538 + $0x60] sm:$0xff]
        %v604 = vld [vmem:[%s538 + $0x68] sm:$0xff]
        %v605 = vld [vmem:[%s538 + $0x70] sm:$0xff]
        %v606 = vld [vmem:[%s538 + $0x78] sm:$0xff]
        %v607 = vld [vmem:[%s477] sm:$0xff]
        %v608 = vld [vmem:[%s477 + $0x8] sm:$0xff]
        %v609 = vld [vmem:[%s477 + $0x10] sm:$0xff]
        %v610 = vld [vmem:[%s477 + $0x18] sm:$0xff]
        %vm611 = vcmask 261120
        %v613 = vsel %vm611, %v591, 0
        %v616 = vsel %vm611, %v592, 0
        %v619 = vsel %vm611, %v593, 0
        %v622 = vsel %vm611, %v594, 0
        %v625 = vsel %vm611, %v595, 0
        %v628 = vsel %vm611, %v596, 0
        %v631 = vsel %vm611, %v597, 0
        %v634 = vsel %vm611, %v598, 0
        %v637 = vsel %vm611, %v599, 0
        %v640 = vsel %vm611, %v600, 0
        %v643 = vsel %vm611, %v601, 0
        %v646 = vsel %vm611, %v602, 0
        %v649 = vsel %vm611, %v603, 0
        %v652 = vsel %vm611, %v604, 0
        %v655 = vsel %vm611, %v605, 0
        %v658 = vsel %vm611, %v606, 0
        %660 = vmatprep.subr.mxu0 0.0
        %661 = vmatpush1.msra.mxu0 %v607
        %662 = vmatprep.subr.mxu0 0.0
        %663 = vmatpush1.msra.mxu0 %v608
        %664 = vmatprep.subr.mxu0 0.0
        %665 = vmatpush1.msra.mxu0 %v609
        %666 = vmatprep.subr.mxu0 0.0
        %667 = vmatpush1.msra.mxu0 %v610
        %668 = vmatprep.subr.mxu0 0.0
        %669 = vmatpush1.msra.mxu0 0.0
        %670 = vmatprep.subr.mxu0 0.0
        %671 = vmatpush1.msra.mxu0 0.0
        %672 = vmatprep.subr.mxu0 0.0
        %673 = vmatpush1.msra.mxu0 0.0
        %674 = vmatprep.subr.mxu0 0.0
        %675 = vmatpush1.msra.mxu0 0.0
        %676 = vmatprep.subr.mxu0 0.0
        %677 = vmatpush1.msra.mxu0 0.0
        %678 = vmatprep.subr.mxu0 0.0
        %679 = vmatpush1.msra.mxu0 0.0
        %680 = vmatprep.subr.mxu0 0.0
        %681 = vmatpush1.msra.mxu0 0.0
        %682 = vmatprep.subr.mxu0 0.0
        %683 = vmatpush1.msra.mxu0 0.0
        %684 = vmatprep.subr.mxu0 0.0
        %685 = vmatpush1.msra.mxu0 0.0
        %686 = vmatprep.subr.mxu0 0.0
        %687 = vmatpush1.msra.mxu0 0.0
        %688 = vmatprep.subr.mxu0 0.0
        %689 = vmatpush1.msra.mxu0 0.0
        %690 = vmatprep.subr.mxu0 0.0
        %691 = vmatpush1.msra.mxu0 0.0
        %692 = vmatprep.subr.mxu0 0.0
        %693 = vmatpush1.msra.mxu0 0.0
        %694 = vmatprep.subr.mxu0 0.0
        %695 = vmatpush1.msra.mxu0 0.0
        %696 = vmatprep.subr.mxu0 0.0
        %697 = vmatpush1.msra.mxu0 0.0
        %698 = vmatprep.subr.mxu0 0.0
        %699 = vmatpush1.msra.mxu0 0.0
        %700 = vmatprep.subr.mxu0 0.0
        %701 = vmatpush1.msra.mxu0 0.0
        %702 = vmatprep.subr.mxu0 0.0
        %703 = vmatpush1.msra.mxu0 0.0
        %704 = vmatprep.subr.mxu0 0.0
        %705 = vmatpush1.msra.mxu0 0.0
        %706 = vmatprep.subr.mxu0 0.0
        %707 = vmatpush1.msra.mxu0 0.0
        %708 = vmatprep.subr.mxu0 0.0
        %709 = vmatpush1.msra.mxu0 0.0
        %710 = vmatprep.subr.mxu0 0.0
        %711 = vmatpush1.msra.mxu0 0.0
        %712 = vmatprep.subr.mxu0 0.0
        %713 = vmatpush1.msra.mxu0 0.0
        %714 = vmatprep.subr.mxu0 0.0
        %715 = vmatpush1.msra.mxu0 0.0
        %716 = vmatprep.subr.mxu0 0.0
        %717 = vmatpush1.msra.mxu0 0.0
        %718 = vmatprep.subr.mxu0 0.0
        %719 = vmatpush1.msra.mxu0 0.0
        %720 = vmatprep.subr.mxu0 0.0
        %721 = vmatpush1.msra.mxu0 0.0
        %722 = vmatprep.subr.mxu0 0.0
        %723 = vmatpush1.msra.mxu0 0.0
        %724 = vmatprep.mubr.f32.mxu0 0.0
        %725 = vmatmul.mubr.f32.gmra.mrb[0].mxu0 %v613
        %v726 = vpop.f32.mrb[0].mxu0
        %v727 = vadd.f32 0.0, %v726
        %v728 = vpop.f32.mrb[0].mxu0
        %729 = vmatprep.mubr.f32.mxu0 0.0
        %730 = vmatmul.mubr.f32.gmra.mrb[0].mxu0 %v616
        %v731 = vpop.f32.mrb[0].mxu0
        %v732 = vadd.f32 0.0, %v731
        %v733 = vpop.f32.mrb[0].mxu0
        %734 = vmatprep.mubr.f32.mxu0 0.0
        %735 = vmatmul.mubr.f32.gmra.mrb[0].mxu0 %v619
        %v736 = vpop.f32.mrb[0].mxu0
        %v737 = vadd.f32 0.0, %v736
        %v738 = vpop.f32.mrb[0].mxu0
        %739 = vmatprep.mubr.f32.mxu0 0.0
        %740 = vmatmul.mubr.f32.gmra.mrb[0].mxu0 %v622
        %v741 = vpop.f32.mrb[0].mxu0
        %v742 = vadd.f32 0.0, %v741
        %v743 = vpop.f32.mrb[0].mxu0
        %744 = vmatprep.mubr.f32.mxu0 0.0
        %745 = vmatmul.mubr.f32.gmra.mrb[0].mxu0 %v625
        %v746 = vpop.f32.mrb[0].mxu0
        %v747 = vadd.f32 0.0, %v746
        %v748 = vpop.f32.mrb[0].mxu0
        %749 = vmatprep.mubr.f32.mxu0 0.0
        %750 = vmatmul.mubr.f32.gmra.mrb[0].mxu0 %v628
        %v751 = vpop.f32.mrb[0].mxu0
        %v752 = vadd.f32 0.0, %v751
        %v753 = vpop.f32.mrb[0].mxu0
        %754 = vmatprep.mubr.f32.mxu0 0.0
        %755 = vmatmul.mubr.f32.gmra.mrb[0].mxu0 %v631
        %v756 = vpop.f32.mrb[0].mxu0
        %v757 = vadd.f32 0.0, %v756
        %v758 = vpop.f32.mrb[0].mxu0
        %759 = vmatprep.mubr.f32.mxu0 0.0
        %760 = vmatmul.mubr.f32.gmra.mrb[0].mxu0 %v634
        %v761 = vpop.f32.mrb[0].mxu0
        %v762 = vadd.f32 0.0, %v761
        %v763 = vpop.f32.mrb[0].mxu0
        %764 = vmatprep.mubr.f32.mxu0 0.0
        %765 = vmatmul.mubr.f32.gmra.mrb[0].mxu0 %v637
        %v766 = vpop.f32.mrb[0].mxu0
        %v767 = vadd.f32 0.0, %v766
        %v768 = vpop.f32.mrb[0].mxu0
        %769 = vmatprep.mubr.f32.mxu0 0.0
        %770 = vmatmul.mubr.f32.gmra.mrb[0].mxu0 %v640
        %v771 = vpop.f32.mrb[0].mxu0
        %v772 = vadd.f32 0.0, %v771
        %v773 = vpop.f32.mrb[0].mxu0
        %774 = vmatprep.mubr.f32.mxu0 0.0
        %775 = vmatmul.mubr.f32.gmra.mrb[0].mxu0 %v643
        %v776 = vpop.f32.mrb[0].mxu0
        %v777 = vadd.f32 0.0, %v776
        %v778 = vpop.f32.mrb[0].mxu0
        %779 = vmatprep.mubr.f32.mxu0 0.0
        %780 = vmatmul.mubr.f32.gmra.mrb[0].mxu0 %v646
        %v781 = vpop.f32.mrb[0].mxu0
        %v782 = vadd.f32 0.0, %v781
        %v783 = vpop.f32.mrb[0].mxu0
        %784 = vmatprep.mubr.f32.mxu0 0.0
        %785 = vmatmul.mubr.f32.gmra.mrb[0].mxu0 %v649
        %v786 = vpop.f32.mrb[0].mxu0
        %v787 = vadd.f32 0.0, %v786
        %v788 = vpop.f32.mrb[0].mxu0
        %789 = vmatprep.mubr.f32.mxu0 0.0
        %790 = vmatmul.mubr.f32.gmra.mrb[0].mxu0 %v652
        %v791 = vpop.f32.mrb[0].mxu0
        %v792 = vadd.f32 0.0, %v791
        %v793 = vpop.f32.mrb[0].mxu0
        %794 = vmatprep.mubr.f32.mxu0 0.0
        %795 = vmatmul.mubr.f32.gmra.mrb[0].mxu0 %v655
        %v796 = vpop.f32.mrb[0].mxu0
        %v797 = vadd.f32 0.0, %v796
        %v798 = vpop.f32.mrb[0].mxu0
        %799 = vmatprep.mubr.f32.mxu0 0.0
        %800 = vmatmul.mubr.f32.gmra.mrb[0].mxu0 %v658
        %v801 = vpop.f32.mrb[0].mxu0
        %v802 = vadd.f32 0.0, %v801
        %v803 = vpop.f32.mrb[0].mxu0
        %804 = vdwg.mxu0
        %s805 = sld [smem:[#allocation4]]
        %v806 = vmul.f32 %v727, %v727
        %v807 = vmul.f32 %v732, %v732
        %v808 = vmul.f32 %v737, %v737
        %v809 = vmul.f32 %v742, %v742
        %v810 = vmul.f32 %v747, %v747
        %v811 = vmul.f32 %v752, %v752
        %v812 = vmul.f32 %v757, %v757
        %v813 = vmul.f32 %v762, %v762
        %v814 = vmul.f32 %v767, %v767
        %v815 = vmul.f32 %v772, %v772
        %v816 = vmul.f32 %v777, %v777
        %v817 = vmul.f32 %v782, %v782
        %v818 = vmul.f32 %v787, %v787
        %v819 = vmul.f32 %v792, %v792
        %v820 = vmul.f32 %v797, %v797
        %v821 = vmul.f32 %v802, %v802
        %v822 = vstv %s805
        %v823 = vmul.f32 %v822, %v727
        %v824 = vmul.f32 %v822, %v732
        %v825 = vmul.f32 %v822, %v737
        %v826 = vmul.f32 %v822, %v742
        %v827 = vmul.f32 %v822, %v747
        %v828 = vmul.f32 %v822, %v752
        %v829 = vmul.f32 %v822, %v757
        %v830 = vmul.f32 %v822, %v762
        %v831 = vmul.f32 %v822, %v767
        %v832 = vmul.f32 %v822, %v772
        %v833 = vmul.f32 %v822, %v777
        %v834 = vmul.f32 %v822, %v782
        %v835 = vmul.f32 %v822, %v787
        %v836 = vmul.f32 %v822, %v792
        %v837 = vmul.f32 %v822, %v797
        %v838 = vmul.f32 %v822, %v802
        %s839 = sld [smem:[#allocation4 + $0x1]]
        %v840 = vld [vmem:[%s484] sm:$0xff]
        %v841 = vld [vmem:[%s484 + $0x8] sm:$0xff]
        %v842 = vld [vmem:[%s484 + $0x10] sm:$0xff]
        %v843 = vld [vmem:[%s484 + $0x18] sm:$0xff]
        %v844 = vld [vmem:[%s484 + $0x20] sm:$0xff]
        %v845 = vld [vmem:[%s484 + $0x28] sm:$0xff]
        %v846 = vld [vmem:[%s484 + $0x30] sm:$0xff]
        %v847 = vld [vmem:[%s484 + $0x38] sm:$0xff]
        %v848 = vld [vmem:[%s484 + $0x40] sm:$0xff]
        %v849 = vld [vmem:[%s484 + $0x48] sm:$0xff]
        %v850 = vld [vmem:[%s484 + $0x50] sm:$0xff]
        %v851 = vld [vmem:[%s484 + $0x58] sm:$0xff]
        %v852 = vld [vmem:[%s484 + $0x60] sm:$0xff]
        %v853 = vld [vmem:[%s484 + $0x68] sm:$0xff]
        %v854 = vld [vmem:[%s484 + $0x70] sm:$0xff]
        %v855 = vld [vmem:[%s484 + $0x78] sm:$0xff]
        %v856 = vmul.f32 %v840, %v840
        %v857 = vmul.f32 %v841, %v841
        %v858 = vmul.f32 %v842, %v842
        %v859 = vmul.f32 %v843, %v843
        %v860 = vmul.f32 %v844, %v844
        %v861 = vmul.f32 %v845, %v845
        %v862 = vmul.f32 %v846, %v846
        %v863 = vmul.f32 %v847, %v847
        %v864 = vmul.f32 %v848, %v848
        %v865 = vmul.f32 %v849, %v849
        %v866 = vmul.f32 %v850, %v850
        %v867 = vmul.f32 %v851, %v851
        %v868 = vmul.f32 %v852, %v852
        %v869 = vmul.f32 %v853, %v853
        %v870 = vmul.f32 %v854, %v854
        %v871 = vmul.f32 %v855, %v855
        %v872 = vadd.f32 %v806, %v856
        %v873 = vadd.f32 %v807, %v857
        %v874 = vadd.f32 %v808, %v858
        %v875 = vadd.f32 %v809, %v859
        %v876 = vadd.f32 %v810, %v860
        %v877 = vadd.f32 %v811, %v861
        %v878 = vadd.f32 %v812, %v862
        %v879 = vadd.f32 %v813, %v863
        %v880 = vadd.f32 %v814, %v864
        %v881 = vadd.f32 %v815, %v865
        %v882 = vadd.f32 %v816, %v866
        %v883 = vadd.f32 %v817, %v867
        %v884 = vadd.f32 %v818, %v868
        %v885 = vadd.f32 %v819, %v869
        %v886 = vadd.f32 %v820, %v870
        %v887 = vadd.f32 %v821, %v871
        %v888 = vstv %s839
        %v889 = vmul.f32 %v888, %v840
        %v890 = vmul.f32 %v888, %v841
        %v891 = vmul.f32 %v888, %v842
        %v892 = vmul.f32 %v888, %v843
        %v893 = vmul.f32 %v888, %v844
        %v894 = vmul.f32 %v888, %v845
        %v895 = vmul.f32 %v888, %v846
        %v896 = vmul.f32 %v888, %v847
        %v897 = vmul.f32 %v888, %v848
        %v898 = vmul.f32 %v888, %v849
        %v899 = vmul.f32 %v888, %v850
        %v900 = vmul.f32 %v888, %v851
        %v901 = vmul.f32 %v888, %v852
        %v902 = vmul.f32 %v888, %v853
        %v903 = vmul.f32 %v888, %v854
        %v904 = vmul.f32 %v888, %v855
        %v905 = vadd.f32 %v823, %v889
        %v906 = vadd.f32 %v824, %v890
        %v907 = vadd.f32 %v825, %v891
        %v908 = vadd.f32 %v826, %v892
        %v909 = vadd.f32 %v827, %v893
        %v910 = vadd.f32 %v828, %v894
        %v911 = vadd.f32 %v829, %v895
        %v912 = vadd.f32 %v830, %v896
        %v913 = vadd.f32 %v831, %v897
        %v914 = vadd.f32 %v832, %v898
        %v915 = vadd.f32 %v833, %v899
        %v916 = vadd.f32 %v834, %v900
        %v917 = vadd.f32 %v835, %v901
        %v918 = vadd.f32 %v836, %v902
        %v919 = vadd.f32 %v837, %v903
        %v920 = vadd.f32 %v838, %v904
        %s921 = sld [smem:[#allocation4 + $0x2]]
        %s922 = scalar_lea.vmem %s484, 128 [#allocation3]
        %v923 = vld [vmem:[%s922] sm:$0xff]
        %v924 = vld [vmem:[%s922 + $0x8] sm:$0xff]
        %v925 = vld [vmem:[%s922 + $0x10] sm:$0xff]
        %v926 = vld [vmem:[%s922 + $0x18] sm:$0xff]
        %v927 = vld [vmem:[%s922 + $0x20] sm:$0xff]
        %v928 = vld [vmem:[%s922 + $0x28] sm:$0xff]
        %v929 = vld [vmem:[%s922 + $0x30] sm:$0xff]
        %v930 = vld [vmem:[%s922 + $0x38] sm:$0xff]
        %v931 = vld [vmem:[%s922 + $0x40] sm:$0xff]
        %v932 = vld [vmem:[%s922 + $0x48] sm:$0xff]
        %v933 = vld [vmem:[%s922 + $0x50] sm:$0xff]
        %v934 = vld [vmem:[%s922 + $0x58] sm:$0xff]
        %v935 = vld [vmem:[%s922 + $0x60] sm:$0xff]
        %v936 = vld [vmem:[%s922 + $0x68] sm:$0xff]
        %v937 = vld [vmem:[%s922 + $0x70] sm:$0xff]
        %v938 = vld [vmem:[%s922 + $0x78] sm:$0xff]
        %v939 = vmul.f32 %v923, %v923
        %v940 = vmul.f32 %v924, %v924
        %v941 = vmul.f32 %v925, %v925
        %v942 = vmul.f32 %v926, %v926
        %v943 = vmul.f32 %v927, %v927
        %v944 = vmul.f32 %v928, %v928
        %v945 = vmul.f32 %v929, %v929
        %v946 = vmul.f32 %v930, %v930
        %v947 = vmul.f32 %v931, %v931
        %v948 = vmul.f32 %v932, %v932
        %v949 = vmul.f32 %v933, %v933
        %v950 = vmul.f32 %v934, %v934
        %v951 = vmul.f32 %v935, %v935
        %v952 = vmul.f32 %v936, %v936
        %v953 = vmul.f32 %v937, %v937
        %v954 = vmul.f32 %v938, %v938
        %v955 = vadd.f32 %v872, %v939
        %v956 = vadd.f32 %v873, %v940
        %v957 = vadd.f32 %v874, %v941
        %v958 = vadd.f32 %v875, %v942
        %v959 = vadd.f32 %v876, %v943
        %v960 = vadd.f32 %v877, %v944
        %v961 = vadd.f32 %v878, %v945
        %v962 = vadd.f32 %v879, %v946
        %v963 = vadd.f32 %v880, %v947
        %v964 = vadd.f32 %v881, %v948
        %v965 = vadd.f32 %v882, %v949
        %v966 = vadd.f32 %v883, %v950
        %v967 = vadd.f32 %v884, %v951
        %v968 = vadd.f32 %v885, %v952
        %v969 = vadd.f32 %v886, %v953
        %v970 = vadd.f32 %v887, %v954
        %v971 = vstv %s921
        %v972 = vmul.f32 %v971, %v923
        %v973 = vmul.f32 %v971, %v924
        %v974 = vmul.f32 %v971, %v925
        %v975 = vmul.f32 %v971, %v926
        %v976 = vmul.f32 %v971, %v927
        %v977 = vmul.f32 %v971, %v928
        %v978 = vmul.f32 %v971, %v929
        %v979 = vmul.f32 %v971, %v930
        %v980 = vmul.f32 %v971, %v931
        %v981 = vmul.f32 %v971, %v932
        %v982 = vmul.f32 %v971, %v933
        %v983 = vmul.f32 %v971, %v934
        %v984 = vmul.f32 %v971, %v935
        %v985 = vmul.f32 %v971, %v936
        %v986 = vmul.f32 %v971, %v937
        %v987 = vmul.f32 %v971, %v938
        %v988 = vadd.f32 %v905, %v972
        %v989 = vadd.f32 %v906, %v973
        %v990 = vadd.f32 %v907, %v974
        %v991 = vadd.f32 %v908, %v975
        %v992 = vadd.f32 %v909, %v976
        %v993 = vadd.f32 %v910, %v977
        %v994 = vadd.f32 %v911, %v978
        %v995 = vadd.f32 %v912, %v979
        %v996 = vadd.f32 %v913, %v980
        %v997 = vadd.f32 %v914, %v981
        %v998 = vadd.f32 %v915, %v982
        %v999 = vadd.f32 %v916, %v983
        %v1000 = vadd.f32 %v917, %v984
        %v1001 = vadd.f32 %v918, %v985
        %v1002 = vadd.f32 %v919, %v986
        %v1003 = vadd.f32 %v920, %v987
        %v1004 = vrsqrt.pop %v955
        %v1005 = vmul.f32 %v955, %v1004
        %vm1006 = vcmp.eq.f32.partialorder %v955, inf
        %v1007 = vsel %vm1006, %v955, %v1005
        %vm1008 = vcmp.eq.f32.partialorder %v955, 0.0
        %v1009 = vand.u32 %v955, 2147483648
        %v1010 = vsel %vm1008, %v1009, %v1007
        %v1011 = vrsqrt.pop %v956
        %v1012 = vmul.f32 %v956, %v1011
        %vm1013 = vcmp.eq.f32.partialorder %v956, inf
        %v1014 = vsel %vm1013, %v956, %v1012
        %vm1015 = vcmp.eq.f32.partialorder %v956, 0.0
        %v1016 = vand.u32 %v956, 2147483648
        %v1017 = vsel %vm1015, %v1016, %v1014
        %v1018 = vrsqrt.pop %v957
        %v1019 = vmul.f32 %v957, %v1018
        %vm1020 = vcmp.eq.f32.partialorder %v957, inf
        %v1021 = vsel %vm1020, %v957, %v1019
        %vm1022 = vcmp.eq.f32.partialorder %v957, 0.0
        %v1023 = vand.u32 %v957, 2147483648
        %v1024 = vsel %vm1022, %v1023, %v1021
        %v1025 = vrsqrt.pop %v958
        %v1026 = vmul.f32 %v958, %v1025
        %vm1027 = vcmp.eq.f32.partialorder %v958, inf
        %v1028 = vsel %vm1027, %v958, %v1026
        %vm1029 = vcmp.eq.f32.partialorder %v958, 0.0
        %v1030 = vand.u32 %v958, 2147483648
        %v1031 = vsel %vm1029, %v1030, %v1028
        %v1032 = vrsqrt.pop %v959
        %v1033 = vmul.f32 %v959, %v1032
        %vm1034 = vcmp.eq.f32.partialorder %v959, inf
        %v1035 = vsel %vm1034, %v959, %v1033
        %vm1036 = vcmp.eq.f32.partialorder %v959, 0.0
        %v1037 = vand.u32 %v959, 2147483648
        %v1038 = vsel %vm1036, %v1037, %v1035
        %v1039 = vrsqrt.pop %v960
        %v1040 = vmul.f32 %v960, %v1039
        %vm1041 = vcmp.eq.f32.partialorder %v960, inf
        %v1042 = vsel %vm1041, %v960, %v1040
        %vm1043 = vcmp.eq.f32.partialorder %v960, 0.0
        %v1044 = vand.u32 %v960, 2147483648
        %v1045 = vsel %vm1043, %v1044, %v1042
        %v1046 = vrsqrt.pop %v961
        %v1047 = vmul.f32 %v961, %v1046
        %vm1048 = vcmp.eq.f32.partialorder %v961, inf
        %v1049 = vsel %vm1048, %v961, %v1047
        %vm1050 = vcmp.eq.f32.partialorder %v961, 0.0
        %v1051 = vand.u32 %v961, 2147483648
        %v1052 = vsel %vm1050, %v1051, %v1049
        %v1053 = vrsqrt.pop %v962
        %v1054 = vmul.f32 %v962, %v1053
        %vm1055 = vcmp.eq.f32.partialorder %v962, inf
        %v1056 = vsel %vm1055, %v962, %v1054
        %vm1057 = vcmp.eq.f32.partialorder %v962, 0.0
        %v1058 = vand.u32 %v962, 2147483648
        %v1059 = vsel %vm1057, %v1058, %v1056
        %v1060 = vrsqrt.pop %v963
        %v1061 = vmul.f32 %v963, %v1060
        %vm1062 = vcmp.eq.f32.partialorder %v963, inf
        %v1063 = vsel %vm1062, %v963, %v1061
        %vm1064 = vcmp.eq.f32.partialorder %v963, 0.0
        %v1065 = vand.u32 %v963, 2147483648
        %v1066 = vsel %vm1064, %v1065, %v1063
        %v1067 = vrsqrt.pop %v964
        %v1068 = vmul.f32 %v964, %v1067
        %vm1069 = vcmp.eq.f32.partialorder %v964, inf
        %v1070 = vsel %vm1069, %v964, %v1068
        %vm1071 = vcmp.eq.f32.partialorder %v964, 0.0
        %v1072 = vand.u32 %v964, 2147483648
        %v1073 = vsel %vm1071, %v1072, %v1070
        %v1074 = vrsqrt.pop %v965
        %v1075 = vmul.f32 %v965, %v1074
        %vm1076 = vcmp.eq.f32.partialorder %v965, inf
        %v1077 = vsel %vm1076, %v965, %v1075
        %vm1078 = vcmp.eq.f32.partialorder %v965, 0.0
        %v1079 = vand.u32 %v965, 2147483648
        %v1080 = vsel %vm1078, %v1079, %v1077
        %v1081 = vrsqrt.pop %v966
        %v1082 = vmul.f32 %v966, %v1081
        %vm1083 = vcmp.eq.f32.partialorder %v966, inf
        %v1084 = vsel %vm1083, %v966, %v1082
        %vm1085 = vcmp.eq.f32.partialorder %v966, 0.0
        %v1086 = vand.u32 %v966, 2147483648
        %v1087 = vsel %vm1085, %v1086, %v1084
        %v1088 = vrsqrt.pop %v967
        %v1089 = vmul.f32 %v967, %v1088
        %vm1090 = vcmp.eq.f32.partialorder %v967, inf
        %v1091 = vsel %vm1090, %v967, %v1089
        %vm1092 = vcmp.eq.f32.partialorder %v967, 0.0
        %v1093 = vand.u32 %v967, 2147483648
        %v1094 = vsel %vm1092, %v1093, %v1091
        %v1095 = vrsqrt.pop %v968
        %v1096 = vmul.f32 %v968, %v1095
        %vm1097 = vcmp.eq.f32.partialorder %v968, inf
        %v1098 = vsel %vm1097, %v968, %v1096
        %vm1099 = vcmp.eq.f32.partialorder %v968, 0.0
        %v1100 = vand.u32 %v968, 2147483648
        %v1101 = vsel %vm1099, %v1100, %v1098
        %v1102 = vrsqrt.pop %v969
        %v1103 = vmul.f32 %v969, %v1102
        %vm1104 = vcmp.eq.f32.partialorder %v969, inf
        %v1105 = vsel %vm1104, %v969, %v1103
        %vm1106 = vcmp.eq.f32.partialorder %v969, 0.0
        %v1107 = vand.u32 %v969, 2147483648
        %v1108 = vsel %vm1106, %v1107, %v1105
        %v1109 = vrsqrt.pop %v970
        %v1110 = vmul.f32 %v970, %v1109
        %vm1111 = vcmp.eq.f32.partialorder %v970, inf
        %v1112 = vsel %vm1111, %v970, %v1110
        %vm1113 = vcmp.eq.f32.partialorder %v970, 0.0
        %v1114 = vand.u32 %v970, 2147483648
        %v1115 = vsel %vm1113, %v1114, %v1112
        %v1116 = vmax.f32 %v1010, 1e-12
        %v1117 = vmax.f32 %v1017, 1e-12
        %v1118 = vmax.f32 %v1024, 1e-12
        %v1119 = vmax.f32 %v1031, 1e-12
        %v1120 = vmax.f32 %v1038, 1e-12
        %v1121 = vmax.f32 %v1045, 1e-12
        %v1122 = vmax.f32 %v1052, 1e-12
        %v1123 = vmax.f32 %v1059, 1e-12
        %v1124 = vmax.f32 %v1066, 1e-12
        %v1125 = vmax.f32 %v1073, 1e-12
        %v1126 = vmax.f32 %v1080, 1e-12
        %v1127 = vmax.f32 %v1087, 1e-12
        %v1128 = vmax.f32 %v1094, 1e-12
        %v1129 = vmax.f32 %v1101, 1e-12
        %v1130 = vmax.f32 %v1108, 1e-12
        %v1131 = vmax.f32 %v1115, 1e-12
        %v1132 = vrcp.pop %v1116
        %v1133 = vmul.f32 %v988, %v1132
        %v1134 = vrcp.pop %v1117
        %v1135 = vmul.f32 %v989, %v1134
        %v1136 = vrcp.pop %v1118
        %v1137 = vmul.f32 %v990, %v1136
        %v1138 = vrcp.pop %v1119
        %v1139 = vmul.f32 %v991, %v1138
        %v1140 = vrcp.pop %v1120
        %v1141 = vmul.f32 %v992, %v1140
        %v1142 = vrcp.pop %v1121
        %v1143 = vmul.f32 %v993, %v1142
        %v1144 = vrcp.pop %v1122
        %v1145 = vmul.f32 %v994, %v1144
        %v1146 = vrcp.pop %v1123
        %v1147 = vmul.f32 %v995, %v1146
        %v1148 = vrcp.pop %v1124
        %v1149 = vmul.f32 %v996, %v1148
        %v1150 = vrcp.pop %v1125
        %v1151 = vmul.f32 %v997, %v1150
        %v1152 = vrcp.pop %v1126
        %v1153 = vmul.f32 %v998, %v1152
        %v1154 = vrcp.pop %v1127
        %v1155 = vmul.f32 %v999, %v1154
        %v1156 = vrcp.pop %v1128
        %v1157 = vmul.f32 %v1000, %v1156
        %v1158 = vrcp.pop %v1129
        %v1159 = vmul.f32 %v1001, %v1158
        %v1160 = vrcp.pop %v1130
        %v1161 = vmul.f32 %v1002, %v1160
        %v1162 = vrcp.pop %v1131
        %v1163 = vmul.f32 %v1003, %v1162
        %1164 = vst [vmem:[%s519] sm:$0xff] %v1133
        %1165 = vst [vmem:[%s519 + $0x8] sm:$0xff] %v1135
        %1166 = vst [vmem:[%s519 + $0x10] sm:$0xff] %v1137
        %1167 = vst [vmem:[%s519 + $0x18] sm:$0xff] %v1139
        %1168 = vst [vmem:[%s519 + $0x20] sm:$0xff] %v1141
        %1169 = vst [vmem:[%s519 + $0x28] sm:$0xff] %v1143
        %1170 = vst [vmem:[%s519 + $0x30] sm:$0xff] %v1145
        %1171 = vst [vmem:[%s519 + $0x38] sm:$0xff] %v1147
        %1172 = vst [vmem:[%s519 + $0x40] sm:$0xff] %v1149
        %1173 = vst [vmem:[%s519 + $0x48] sm:$0xff] %v1151
        %1174 = vst [vmem:[%s519 + $0x50] sm:$0xff] %v1153
        %1175 = vst [vmem:[%s519 + $0x58] sm:$0xff] %v1155
        %1176 = vst [vmem:[%s519 + $0x60] sm:$0xff] %v1157
        %1177 = vst [vmem:[%s519 + $0x68] sm:$0xff] %v1159
        %1178 = vst [vmem:[%s519 + $0x70] sm:$0xff] %v1161
        %1179 = vst [vmem:[%s519 + $0x78] sm:$0xff] %v1163
        %v1180 = vlaneseq
        %v1181 = vshrl.u32 %v1180, 7
        %v1182 = vadd.s32 %v1181, 8
        %v1183 = vadd.s32 %v1181, 16
        %v1184 = vadd.s32 %v1181, 24
        %v1185 = vadd.s32 %v1181, 32
        %v1186 = vadd.s32 %v1181, 40
        %v1187 = vadd.s32 %v1181, 48
        %v1188 = vadd.s32 %v1181, 56
        %v1189 = vadd.s32 %v1181, 64
        %v1190 = vadd.s32 %v1181, 72
        %v1191 = vadd.s32 %v1181, 80
        %v1192 = vadd.s32 %v1181, 88
        %v1193 = vadd.s32 %v1181, 96
        %v1194 = vadd.s32 %v1181, 104
        %v1195 = vadd.s32 %v1181, 112
        %v1196 = vadd.s32 %v1181, 120
        %s1197 = smul.u32 %s23, 128
        %v1198 = vstv %s1197
        %v1199 = vadd.s32 %v1181, %v1198
        %v1200 = vadd.s32 %v1182, %v1198
        %v1201 = vadd.s32 %v1183, %v1198
        %v1202 = vadd.s32 %v1184, %v1198
        %v1203 = vadd.s32 %v1185, %v1198
        %v1204 = vadd.s32 %v1186, %v1198
        %v1205 = vadd.s32 %v1187, %v1198
        %v1206 = vadd.s32 %v1188, %v1198
        %v1207 = vadd.s32 %v1189, %v1198
        %v1208 = vadd.s32 %v1190, %v1198
        %v1209 = vadd.s32 %v1191, %v1198
        %v1210 = vadd.s32 %v1192, %v1198
        %v1211 = vadd.s32 %v1193, %v1198
        %v1212 = vadd.s32 %v1194, %v1198
        %v1213 = vadd.s32 %v1195, %v1198
        %v1214 = vadd.s32 %v1196, %v1198
        %v1215 = vlaneseq
        %v1216 = vand.u32 %v1215, 127
        %s1217 = smul.u32 %s24, 128
        %v1218 = vstv %s1217
        %v1219 = vadd.s32 %v1216, %v1218
        %vm1220 = vcmp.eq.s32.totalorder %v1199, %v1219
        %vm1221 = vcmp.eq.s32.totalorder %v1200, %v1219
        %vm1222 = vcmp.eq.s32.totalorder %v1201, %v1219
        %vm1223 = vcmp.eq.s32.totalorder %v1202, %v1219
        %vm1224 = vcmp.eq.s32.totalorder %v1203, %v1219
        %vm1225 = vcmp.eq.s32.totalorder %v1204, %v1219
        %vm1226 = vcmp.eq.s32.totalorder %v1205, %v1219
        %vm1227 = vcmp.eq.s32.totalorder %v1206, %v1219
        %vm1228 = vcmp.eq.s32.totalorder %v1207, %v1219
        %vm1229 = vcmp.eq.s32.totalorder %v1208, %v1219
        %vm1230 = vcmp.eq.s32.totalorder %v1209, %v1219
        %vm1231 = vcmp.eq.s32.totalorder %v1210, %v1219
        %vm1232 = vcmp.eq.s32.totalorder %v1211, %v1219
        %vm1233 = vcmp.eq.s32.totalorder %v1212, %v1219
        %vm1234 = vcmp.eq.s32.totalorder %v1213, %v1219
        %vm1235 = vcmp.eq.s32.totalorder %v1214, %v1219
        %v1236 = vsel %vm1220, %v1133, 0.0
        %v1237 = vsel %vm1221, %v1135, 0.0
        %v1238 = vsel %vm1222, %v1137, 0.0
        %v1239 = vsel %vm1223, %v1139, 0.0
        %v1240 = vsel %vm1224, %v1141, 0.0
        %v1241 = vsel %vm1225, %v1143, 0.0
        %v1242 = vsel %vm1226, %v1145, 0.0
        %v1243 = vsel %vm1227, %v1147, 0.0
        %v1244 = vsel %vm1228, %v1149, 0.0
        %v1245 = vsel %vm1229, %v1151, 0.0
        %v1246 = vsel %vm1230, %v1153, 0.0
        %v1247 = vsel %vm1231, %v1155, 0.0
        %v1248 = vsel %vm1232, %v1157, 0.0
        %v1249 = vsel %vm1233, %v1159, 0.0
        %v1250 = vsel %vm1234, %v1161, 0.0
        %v1251 = vsel %vm1235, %v1163, 0.0
        %v1252 = vld [vmem:[%s546] sm:$0xff]
        %v1253 = vld [vmem:[%s546 + $0x8] sm:$0xff]
        %v1254 = vld [vmem:[%s546 + $0x10] sm:$0xff]
        %v1255 = vld [vmem:[%s546 + $0x18] sm:$0xff]
        %v1256 = vld [vmem:[%s546 + $0x20] sm:$0xff]
        %v1257 = vld [vmem:[%s546 + $0x28] sm:$0xff]
        %v1258 = vld [vmem:[%s546 + $0x30] sm:$0xff]
        %v1259 = vld [vmem:[%s546 + $0x38] sm:$0xff]
        %v1260 = vld [vmem:[%s546 + $0x40] sm:$0xff]
        %v1261 = vld [vmem:[%s546 + $0x48] sm:$0xff]
        %v1262 = vld [vmem:[%s546 + $0x50] sm:$0xff]
        %v1263 = vld [vmem:[%s546 + $0x58] sm:$0xff]
        %v1264 = vld [vmem:[%s546 + $0x60] sm:$0xff]
        %v1265 = vld [vmem:[%s546 + $0x68] sm:$0xff]
        %v1266 = vld [vmem:[%s546 + $0x70] sm:$0xff]
        %v1267 = vld [vmem:[%s546 + $0x78] sm:$0xff]
        %1268 = vadd.xlane.f32.xlu0 %v1236
        %v1269 = vpop.xlane.xlu0 %1268
        %1270 = vadd.xlane.f32.xlu0 %v1237
        %v1271 = vpop.xlane.xlu0 %1270
        %1272 = vadd.xlane.f32.xlu0 %v1238
        %v1273 = vpop.xlane.xlu0 %1272
        %1274 = vadd.xlane.f32.xlu0 %v1239
        %v1275 = vpop.xlane.xlu0 %1274
        %1276 = vadd.xlane.f32.xlu0 %v1240
        %v1277 = vpop.xlane.xlu0 %1276
        %1278 = vadd.xlane.f32.xlu0 %v1241
        %v1279 = vpop.xlane.xlu0 %1278
        %1280 = vadd.xlane.f32.xlu0 %v1242
        %v1281 = vpop.xlane.xlu0 %1280
        %1282 = vadd.xlane.f32.xlu0 %v1243
        %v1283 = vpop.xlane.xlu0 %1282
        %1284 = vadd.xlane.f32.xlu0 %v1244
        %v1285 = vpop.xlane.xlu0 %1284
        %1286 = vadd.xlane.f32.xlu0 %v1245
        %v1287 = vpop.xlane.xlu0 %1286
        %1288 = vadd.xlane.f32.xlu0 %v1246
        %v1289 = vpop.xlane.xlu0 %1288
        %1290 = vadd.xlane.f32.xlu0 %v1247
        %v1291 = vpop.xlane.xlu0 %1290
        %1292 = vadd.xlane.f32.xlu0 %v1248
        %v1293 = vpop.xlane.xlu0 %1292
        %1294 = vadd.xlane.f32.xlu0 %v1249
        %v1295 = vpop.xlane.xlu0 %1294
        %1296 = vadd.xlane.f32.xlu0 %v1250
        %v1297 = vpop.xlane.xlu0 %1296
        %1298 = vadd.xlane.f32.xlu0 %v1251
        %v1299 = vpop.xlane.xlu0 %1298
        %v1300 = vadd.f32 %v1252, %v1269
        %v1301 = vadd.f32 %v1253, %v1271
        %v1302 = vadd.f32 %v1254, %v1273
        %v1303 = vadd.f32 %v1255, %v1275
        %v1304 = vadd.f32 %v1256, %v1277
        %v1305 = vadd.f32 %v1257, %v1279
        %v1306 = vadd.f32 %v1258, %v1281
        %v1307 = vadd.f32 %v1259, %v1283
        %v1308 = vadd.f32 %v1260, %v1285
        %v1309 = vadd.f32 %v1261, %v1287
        %v1310 = vadd.f32 %v1262, %v1289
        %v1311 = vadd.f32 %v1263, %v1291
        %v1312 = vadd.f32 %v1264, %v1293
        %v1313 = vadd.f32 %v1265, %v1295
        %v1314 = vadd.f32 %v1266, %v1297
        %v1315 = vadd.f32 %v1267, %v1299
        %vm1316 = vcmask 7168
        %1317 = vst.msk [vmem:[%s546] sm:$0xff] %vm1316, %v1300
        %1318 = vst.msk [vmem:[%s546 + $0x8] sm:$0xff] %vm1316, %v1301
        %1319 = vst.msk [vmem:[%s546 + $0x10] sm:$0xff] %vm1316, %v1302
        %1320 = vst.msk [vmem:[%s546 + $0x18] sm:$0xff] %vm1316, %v1303
        %1321 = vst.msk [vmem:[%s546 + $0x20] sm:$0xff] %vm1316, %v1304
        %1322 = vst.msk [vmem:[%s546 + $0x28] sm:$0xff] %vm1316, %v1305
        %1323 = vst.msk [vmem:[%s546 + $0x30] sm:$0xff] %vm1316, %v1306
        %1324 = vst.msk [vmem:[%s546 + $0x38] sm:$0xff] %vm1316, %v1307
        %1325 = vst.msk [vmem:[%s546 + $0x40] sm:$0xff] %vm1316, %v1308
        %1326 = vst.msk [vmem:[%s546 + $0x48] sm:$0xff] %vm1316, %v1309
        %1327 = vst.msk [vmem:[%s546 + $0x50] sm:$0xff] %vm1316, %v1310
        %1328 = vst.msk [vmem:[%s546 + $0x58] sm:$0xff] %vm1316, %v1311
        %1329 = vst.msk [vmem:[%s546 + $0x60] sm:$0xff] %vm1316, %v1312
        %1330 = vst.msk [vmem:[%s546 + $0x68] sm:$0xff] %vm1316, %v1313
        %1331 = vst.msk [vmem:[%s546 + $0x70] sm:$0xff] %vm1316, %v1314
        %1332 = vst.msk [vmem:[%s546 + $0x78] sm:$0xff] %vm1316, %v1315
        %v1333 = vld [vmem:[%s552] sm:$0xff]
        %v1334 = vld [vmem:[%s552 + $0x8] sm:$0xff]
        %v1335 = vld [vmem:[%s552 + $0x10] sm:$0xff]
        %v1336 = vld [vmem:[%s552 + $0x18] sm:$0xff]
        %v1337 = vld [vmem:[%s552 + $0x20] sm:$0xff]
        %v1338 = vld [vmem:[%s552 + $0x28] sm:$0xff]
        %v1339 = vld [vmem:[%s552 + $0x30] sm:$0xff]
        %v1340 = vld [vmem:[%s552 + $0x38] sm:$0xff]
        %v1341 = vld [vmem:[%s552 + $0x40] sm:$0xff]
        %v1342 = vld [vmem:[%s552 + $0x48] sm:$0xff]
        %v1343 = vld [vmem:[%s552 + $0x50] sm:$0xff]
        %v1344 = vld [vmem:[%s552 + $0x58] sm:$0xff]
        %v1345 = vld [vmem:[%s552 + $0x60] sm:$0xff]
        %v1346 = vld [vmem:[%s552 + $0x68] sm:$0xff]
        %v1347 = vld [vmem:[%s552 + $0x70] sm:$0xff]
        %v1348 = vld [vmem:[%s552 + $0x78] sm:$0xff]
        %v1349 = vmul.f32 %v1133, %v1133
        %v1350 = vmul.f32 %v1135, %v1135
        %v1351 = vmul.f32 %v1137, %v1137
        %v1352 = vmul.f32 %v1139, %v1139
        %v1353 = vmul.f32 %v1141, %v1141
        %v1354 = vmul.f32 %v1143, %v1143
        %v1355 = vmul.f32 %v1145, %v1145
        %v1356 = vmul.f32 %v1147, %v1147
        %v1357 = vmul.f32 %v1149, %v1149
        %v1358 = vmul.f32 %v1151, %v1151
        %v1359 = vmul.f32 %v1153, %v1153
        %v1360 = vmul.f32 %v1155, %v1155
        %v1361 = vmul.f32 %v1157, %v1157
        %v1362 = vmul.f32 %v1159, %v1159
        %v1363 = vmul.f32 %v1161, %v1161
        %v1364 = vmul.f32 %v1163, %v1163
        %1365 = vadd.xlane.f32.xlu0 %v1349
        %v1366 = vpop.xlane.xlu0 %1365
        %1367 = vadd.xlane.f32.xlu0 %v1350
        %v1368 = vpop.xlane.xlu0 %1367
        %1369 = vadd.xlane.f32.xlu0 %v1351
        %v1370 = vpop.xlane.xlu0 %1369
        %1371 = vadd.xlane.f32.xlu0 %v1352
        %v1372 = vpop.xlane.xlu0 %1371
        %1373 = vadd.xlane.f32.xlu0 %v1353
        %v1374 = vpop.xlane.xlu0 %1373
        %1375 = vadd.xlane.f32.xlu0 %v1354
        %v1376 = vpop.xlane.xlu0 %1375
        %1377 = vadd.xlane.f32.xlu0 %v1355
        %v1378 = vpop.xlane.xlu0 %1377
        %1379 = vadd.xlane.f32.xlu0 %v1356
        %v1380 = vpop.xlane.xlu0 %1379
        %1381 = vadd.xlane.f32.xlu0 %v1357
        %v1382 = vpop.xlane.xlu0 %1381
        %1383 = vadd.xlane.f32.xlu0 %v1358
        %v1384 = vpop.xlane.xlu0 %1383
        %1385 = vadd.xlane.f32.xlu0 %v1359
        %v1386 = vpop.xlane.xlu0 %1385
        %1387 = vadd.xlane.f32.xlu0 %v1360
        %v1388 = vpop.xlane.xlu0 %1387
        %1389 = vadd.xlane.f32.xlu0 %v1361
        %v1390 = vpop.xlane.xlu0 %1389
        %1391 = vadd.xlane.f32.xlu0 %v1362
        %v1392 = vpop.xlane.xlu0 %1391
        %1393 = vadd.xlane.f32.xlu0 %v1363
        %v1394 = vpop.xlane.xlu0 %1393
        %1395 = vadd.xlane.f32.xlu0 %v1364
        %v1396 = vpop.xlane.xlu0 %1395
        %v1397 = vadd.f32 %v1333, %v1366
        %v1398 = vadd.f32 %v1334, %v1368
        %v1399 = vadd.f32 %v1335, %v1370
        %v1400 = vadd.f32 %v1336, %v1372
        %v1401 = vadd.f32 %v1337, %v1374
        %v1402 = vadd.f32 %v1338, %v1376
        %v1403 = vadd.f32 %v1339, %v1378
        %v1404 = vadd.f32 %v1340, %v1380
        %v1405 = vadd.f32 %v1341, %v1382
        %v1406 = vadd.f32 %v1342, %v1384
        %v1407 = vadd.f32 %v1343, %v1386
        %v1408 = vadd.f32 %v1344, %v1388
        %v1409 = vadd.f32 %v1345, %v1390
        %v1410 = vadd.f32 %v1346, %v1392
        %v1411 = vadd.f32 %v1347, %v1394
        %v1412 = vadd.f32 %v1348, %v1396
        %1413 = vst.msk [vmem:[%s552] sm:$0xff] %vm1316, %v1397
        %1414 = vst.msk [vmem:[%s552 + $0x8] sm:$0xff] %vm1316, %v1398
        %1415 = vst.msk [vmem:[%s552 + $0x10] sm:$0xff] %vm1316, %v1399
        %1416 = vst.msk [vmem:[%s552 + $0x18] sm:$0xff] %vm1316, %v1400
        %1417 = vst.msk [vmem:[%s552 + $0x20] sm:$0xff] %vm1316, %v1401
        %1418 = vst.msk [vmem:[%s552 + $0x28] sm:$0xff] %vm1316, %v1402
        %1419 = vst.msk [vmem:[%s552 + $0x30] sm:$0xff] %vm1316, %v1403
        %1420 = vst.msk [vmem:[%s552 + $0x38] sm:$0xff] %vm1316, %v1404
        %1421 = vst.msk [vmem:[%s552 + $0x40] sm:$0xff] %vm1316, %v1405
        %1422 = vst.msk [vmem:[%s552 + $0x48] sm:$0xff] %vm1316, %v1406
        %1423 = vst.msk [vmem:[%s552 + $0x50] sm:$0xff] %vm1316, %v1407
        %1424 = vst.msk [vmem:[%s552 + $0x58] sm:$0xff] %vm1316, %v1408
        %1425 = vst.msk [vmem:[%s552 + $0x60] sm:$0xff] %vm1316, %v1409
        %1426 = vst.msk [vmem:[%s552 + $0x68] sm:$0xff] %vm1316, %v1410
        %1427 = vst.msk [vmem:[%s552 + $0x70] sm:$0xff] %vm1316, %v1411
        %1428 = vst.msk [vmem:[%s552 + $0x78] sm:$0xff] %vm1316, %v1412
        %s1429 = sand.u32 %s142, 1
        %s1430 = sand.u32 %s142, 1
        %s1431 = smul.addr %s1430, 128
        %s1432 = scalar_lea.vmem [#allocation6], %s1431
        %s1433 = smul.u32 16, %s23
        %p1434 = scmp.lt.s32.totalorder %s1433, 31
        %s1435 = scalar_select %p1434, %s1433, 31
        %s1436 = smul.addr %s1435, 8
        %s1437 = scalar_lea.vmem %s5, %s1436
        %s1438 = smul.u32 16, %s23
        %p1439 = scmp.lt.s32.totalorder %s1438, 31
        %s1440 = scalar_select %p1439, %s1438, 31
        %s1441 = smul.addr %s1440, 8
        %s1442 = scalar_lea.vmem %s6, %s1441
        // Predicated region
        $region121: #{weight_train2_forward.1} parent=103 // pred_check
          %p1443 = pneg %p152
        $region122: #{weight_train2_forward.1} parent=103 // pred_check_branch
          %1445 = sbr.rel (%p1443) target = $region124
        $region123: #{weight_train2_forward.1} parent=103 // pred_region
          %s1446 = smul.u32 16, %s23
          %s1447 = smul.addr %s1446, 2
          %s1448 = sadd.s32 %s24, %s1447
          %s1449 = smul.addr %s1448, 8
          %s1450 = scalar_lea.vmem %s4, %s1449
          // Predicated region
          $region125: #{weight_train2_forward.1} parent=123 // pred_check
            _
          $region126: #{weight_train2_forward.1} parent=123 // pred_check_branch
            %1452 = sbr.rel (0) target = $region128
          $region127: #{weight_train2_forward.1} parent=123 // pred_region
            // Predicated region
            $region129: #{weight_train2_forward.1} parent=127 // pred_check
              _
            $region130: #{weight_train2_forward.1} parent=127 // pred_check_branch
              %1454 = sbr.rel (0) target = $region132
            $region131: #{weight_train2_forward.1} parent=127 // pred_region
              // Predicated region
              $region144: #{weight_train2_forward.1} parent=131 // pred_check
                _
              $region145: #{weight_train2_forward.1} parent=131 // pred_check_branch
                %1499 = sbr.rel (0) target = $region147
              $region146: #{weight_train2_forward.1} parent=131 // pred_region
                loop: start=0, step=1, limit=1
                $region148: #{weight_train2_forward.1} parent=146 // loop_pre_header
                  _
                $region149: #{weight_train2_forward.1} parent=146 // loop_header
                  %s1501 = sphi 0, %s1505
                  %p1502 = scmp.ge.s32.totalorder %s1501, 1
                  %s1506 = sphi %s1432, %s1432
                  %s1507 = sphi %s1450, %s1450
                $region150: #{weight_train2_forward.1} parent=146 // loop_header_branch
                  %1504 = sbr.rel (%p1502) target = $region154
                $region151: #{weight_train2_forward.1} parent=146 // loop_body
                  %v1508 = vld [vmem:[%s1506] sm:$0xff]
                  %1509 = vst [vmem:[%s1507] sm:$0xff] %v1508
                  %v1510 = vld [vmem:[%s1506 + $0x8] sm:$0xff]
                  %1511 = vst [vmem:[%s1507 + $0x10] sm:$0xff] %v1510
                  %v1512 = vld [vmem:[%s1506 + $0x10] sm:$0xff]
                  %1513 = vst [vmem:[%s1507 + $0x20] sm:$0xff] %v1512
                  %v1514 = vld [vmem:[%s1506 + $0x18] sm:$0xff]
                  %1515 = vst [vmem:[%s1507 + $0x30] sm:$0xff] %v1514
                  %v1516 = vld [vmem:[%s1506 + $0x20] sm:$0xff]
                  %1517 = vst [vmem:[%s1507 + $0x40] sm:$0xff] %v1516
                  %v1518 = vld [vmem:[%s1506 + $0x28] sm:$0xff]
                  %1519 = vst [vmem:[%s1507 + $0x50] sm:$0xff] %v1518
                  %v1520 = vld [vmem:[%s1506 + $0x30] sm:$0xff]
                  %1521 = vst [vmem:[%s1507 + $0x60] sm:$0xff] %v1520
                  %v1522 = vld [vmem:[%s1506 + $0x38] sm:$0xff]
                  %1523 = vst [vmem:[%s1507 + $0x70] sm:$0xff] %v1522
                  %v1524 = vld [vmem:[%s1506 + $0x40] sm:$0xff]
                  %1525 = vst [vmem:[%s1507 + $0x80] sm:$0xff] %v1524
                  %v1526 = vld [vmem:[%s1506 + $0x48] sm:$0xff]
                  %1527 = vst [vmem:[%s1507 + $0x90] sm:$0xff] %v1526
                  %v1528 = vld [vmem:[%s1506 + $0x50] sm:$0xff]
                  %1529 = vst [vmem:[%s1507 + $0xa0] sm:$0xff] %v1528
                  %v1530 = vld [vmem:[%s1506 + $0x58] sm:$0xff]
                  %1531 = vst [vmem:[%s1507 + $0xb0] sm:$0xff] %v1530
                  %v1532 = vld [vmem:[%s1506 + $0x60] sm:$0xff]
                  %1533 = vst [vmem:[%s1507 + $0xc0] sm:$0xff] %v1532
                  %v1534 = vld [vmem:[%s1506 + $0x68] sm:$0xff]
                  %1535 = vst [vmem:[%s1507 + $0xd0] sm:$0xff] %v1534
                  %v1536 = vld [vmem:[%s1506 + $0x70] sm:$0xff]
                  %1537 = vst [vmem:[%s1507 + $0xe0] sm:$0xff] %v1536
                  %v1538 = vld [vmem:[%s1506 + $0x78] sm:$0xff]
                  %1539 = vst [vmem:[%s1507 + $0xf0] sm:$0xff] %v1538
                $region152: #{weight_train2_forward.1} parent=146 // loop_footer
                  %s1505 = sadd.s32 1, %s1501
                $region153: #{weight_train2_forward.1} parent=146 // loop_footer_branch
                  %1500 = sbr.rel target = $region149
                $region154: #{weight_train2_forward.1} parent=146 // loop_exit
                  _
              $region147: #{weight_train2_forward.1} parent=131 // pred_fallthru
                _
              // Predicated region
              $region155: #{weight_train2_forward.1} parent=131 // pred_check
                _
              $region156: #{weight_train2_forward.1} parent=131 // pred_check_branch
                %1541 = sbr.rel target = $region158
              $region157: #{weight_train2_forward.1} parent=131 // pred_region
                _
              $region158: #{weight_train2_forward.1} parent=131 // pred_fallthru
                _
            $region132: #{weight_train2_forward.1} parent=127 // pred_fallthru
              _
            // Predicated region
            $region133: #{weight_train2_forward.1} parent=127 // pred_check
              _
            $region134: #{weight_train2_forward.1} parent=127 // pred_check_branch
              %1456 = sbr.rel target = $region136
            $region135: #{weight_train2_forward.1} parent=127 // pred_region
              loop: start=0, step=1, limit=1
              $region137: #{weight_train2_forward.1} parent=135 // loop_pre_header
                _
              $region138: #{weight_train2_forward.1} parent=135 // loop_header
                %s1459 = sphi 0, %s1463
                %p1460 = scmp.ge.s32.totalorder %s1459, 1
                %s1464 = sphi %s1432, %s1432
                %s1465 = sphi %s1450, %s1450
              $region139: #{weight_train2_forward.1} parent=135 // loop_header_branch
                %1462 = sbr.rel (%p1460) target = $region143
              $region140: #{weight_train2_forward.1} parent=135 // loop_body
                %v1466 = vld [vmem:[%s1464] sm:$0xff]
                %1467 = vst [vmem:[%s1465] sm:$0xff] %v1466
                %v1468 = vld [vmem:[%s1464 + $0x8] sm:$0xff]
                %1469 = vst [vmem:[%s1465 + $0x10] sm:$0xff] %v1468
                %v1470 = vld [vmem:[%s1464 + $0x10] sm:$0xff]
                %1471 = vst [vmem:[%s1465 + $0x20] sm:$0xff] %v1470
                %v1472 = vld [vmem:[%s1464 + $0x18] sm:$0xff]
                %1473 = vst [vmem:[%s1465 + $0x30] sm:$0xff] %v1472
                %v1474 = vld [vmem:[%s1464 + $0x20] sm:$0xff]
                %1475 = vst [vmem:[%s1465 + $0x40] sm:$0xff] %v1474
                %v1476 = vld [vmem:[%s1464 + $0x28] sm:$0xff]
                %1477 = vst [vmem:[%s1465 + $0x50] sm:$0xff] %v1476
                %v1478 = vld [vmem:[%s1464 + $0x30] sm:$0xff]
                %1479 = vst [vmem:[%s1465 + $0x60] sm:$0xff] %v1478
                %v1480 = vld [vmem:[%s1464 + $0x38] sm:$0xff]
                %1481 = vst [vmem:[%s1465 + $0x70] sm:$0xff] %v1480
                %v1482 = vld [vmem:[%s1464 + $0x40] sm:$0xff]
                %1483 = vst [vmem:[%s1465 + $0x80] sm:$0xff] %v1482
                %v1484 = vld [vmem:[%s1464 + $0x48] sm:$0xff]
                %1485 = vst [vmem:[%s1465 + $0x90] sm:$0xff] %v1484
                %v1486 = vld [vmem:[%s1464 + $0x50] sm:$0xff]
                %1487 = vst [vmem:[%s1465 + $0xa0] sm:$0xff] %v1486
                %v1488 = vld [vmem:[%s1464 + $0x58] sm:$0xff]
                %1489 = vst [vmem:[%s1465 + $0xb0] sm:$0xff] %v1488
                %v1490 = vld [vmem:[%s1464 + $0x60] sm:$0xff]
                %1491 = vst [vmem:[%s1465 + $0xc0] sm:$0xff] %v1490
                %v1492 = vld [vmem:[%s1464 + $0x68] sm:$0xff]
                %1493 = vst [vmem:[%s1465 + $0xd0] sm:$0xff] %v1492
                %v1494 = vld [vmem:[%s1464 + $0x70] sm:$0xff]
                %1495 = vst [vmem:[%s1465 + $0xe0] sm:$0xff] %v1494
                %v1496 = vld [vmem:[%s1464 + $0x78] sm:$0xff]
                %1497 = vst [vmem:[%s1465 + $0xf0] sm:$0xff] %v1496
              $region141: #{weight_train2_forward.1} parent=135 // loop_footer
                %s1463 = sadd.s32 1, %s1459
              $region142: #{weight_train2_forward.1} parent=135 // loop_footer_branch
                %1458 = sbr.rel target = $region138
              $region143: #{weight_train2_forward.1} parent=135 // loop_exit
                _
            $region136: #{weight_train2_forward.1} parent=127 // pred_fallthru
              _
          $region128: #{weight_train2_forward.1} parent=123 // pred_fallthru
            _
          %1542 = vnop
        $region124: #{weight_train2_forward.1} parent=103 // pred_fallthru
          _
        // Predicated region
        $region159: #{weight_train2_forward.1} parent=103 // pred_check
          %p1543 = pneg %p178
        $region160: #{weight_train2_forward.1} parent=103 // pred_check_branch
          %1545 = sbr.rel (%p1543) target = $region162
        $region161: #{weight_train2_forward.1} parent=103 // pred_region
          %s1546 = smul.u32 16, %s23
        $region162: #{weight_train2_forward.1} parent=103 // pred_fallthru
          _
        // Predicated region
        $region163: #{weight_train2_forward.1} parent=103 // pred_check
          %p1547 = pneg %p204
        $region164: #{weight_train2_forward.1} parent=103 // pred_check_branch
          %1549 = sbr.rel (%p1547) target = $region166
        $region165: #{weight_train2_forward.1} parent=103 // pred_region
          %s1550 = smul.u32 16, %s23
        $region166: #{weight_train2_forward.1} parent=103 // pred_fallthru
          _
      $region104: #{weight_train2_forward.1} parent=5 // pred_fallthru
        _
      %p1551 = scmp.le.s32.totalorder 2, %s14
      // Predicated region
      $region167: #{weight_train2_forward.1} parent=5 // pred_check
        %p1552 = pneg %p1551
      $region168: #{weight_train2_forward.1} parent=5 // pred_check_branch
        %1554 = sbr.rel (%p1552) target = $region170
      $region169: #{weight_train2_forward.1} parent=5 // pred_region
        %s1555 = ssub.s32 %s14, 2
        // Predicated region
        $region171: #{weight_train2_forward.1} parent=169 // pred_check
          %p1556 = pneg %p158
        $region172: #{weight_train2_forward.1} parent=169 // pred_check_branch
          %1558 = sbr.rel (%p1556) target = $region174
        $region173: #{weight_train2_forward.1} parent=169 // pred_region
          %s1559 = sand.u32 %s143, 1
          %s1560 = sand.u32 %s143, 1
          %s1561 = smul.addr %s1560, 128
          %s1562 = scalar_lea.vmem [#allocation6], %s1561
        $region174: #{weight_train2_forward.1} parent=169 // pred_fallthru
          _
        // Predicated region
        $region175: #{weight_train2_forward.1} parent=169 // pred_check
          %p1563 = pneg %p184
        $region176: #{weight_train2_forward.1} parent=169 // pred_check_branch
          %1565 = sbr.rel (%p1563) target = $region178
        $region177: #{weight_train2_forward.1} parent=169 // pred_region
          %s1566 = smul.u32 16, %s25
          %p1567 = scmp.lt.s32.totalorder %s1566, 31
          %s1568 = scalar_select %p1567, %s1566, 31
          %s1569 = smul.addr %s1568, 8
          %s1570 = scalar_lea.vmem %s5, %s1569
        $region178: #{weight_train2_forward.1} parent=169 // pred_fallthru
          _
        // Predicated region
        $region179: #{weight_train2_forward.1} parent=169 // pred_check
          %p1571 = pneg %p210
        $region180: #{weight_train2_forward.1} parent=169 // pred_check_branch
          %1573 = sbr.rel (%p1571) target = $region182
        $region181: #{weight_train2_forward.1} parent=169 // pred_region
          %s1574 = smul.u32 16, %s25
          %p1575 = scmp.lt.s32.totalorder %s1574, 31
          %s1576 = scalar_select %p1575, %s1574, 31
          %s1577 = smul.addr %s1576, 8
          %s1578 = scalar_lea.vmem %s6, %s1577
        $region182: #{weight_train2_forward.1} parent=169 // pred_fallthru
          _
      $region170: #{weight_train2_forward.1} parent=5 // pred_fallthru
        _
    $region6: #{weight_train2_forward.1} parent=1 // loop_footer
      %s18 = sadd.s32 1, %s14
    $region7: #{weight_train2_forward.1} parent=1 // loop_footer_branch
      %13 = sbr.rel target = $region3
    $region8: #{weight_train2_forward.1} parent=1 // loop_exit
      _
    %1579 = vsyncpa [#allocation5], 1
    %s1580 = scalar_lea.sflag [#allocation5], 1
    %1581 = vsyncpa %s1580, 1

</llo_original>
